<compile_context>
chip_gen: v6e
topology: v6e:2x2x1
jax: 0.10.0
libtpu: 0.0.40
codegen_flags: <defaults>
</compile_context>

<pallas_src>
import math

import jax
import jax.numpy as jnp
from jax.experimental import pallas as pl
from jax.experimental.pallas import tpu as pltpu

# ----------------------------- model constants ------------------------------
D_MODEL = 4
LAST_DIM = 2 * D_MODEL                 # 8
NUM_OCTAVES = 4
OCTAVE = 8
SEQ_LEN = 8
HIDDEN = 32
BATCH = 2
NOTE_INPUT = NUM_OCTAVES * LAST_DIM    # 32

_MXU_DTYPE = jnp.bfloat16              # MXU operand dtype (single-pass matmuls)


# ------------------------------ kernel helpers -------------------------------
def _lstm_recurrence(xw, w_hh, hidden):
    """Serial LSTM recurrence, input projection already hoisted.

    xw   : (T, N, 4H) f32, time-leading:  x_t @ W_ih^T + (b_ih + b_hh),
           PyTorch gate order (i, f, g, o) along the 4H axis.
           xw[t] is a contiguous vreg slab -> free static slice per step.
    w_hh : (H, 4H) bf16  (= weight_hh.T)
    Returns h_T : (N, H) f32, hidden state after the last step.
    """
    steps, n, _ = xw.shape
    h = jnp.zeros((n, hidden), jnp.float32)
    c = jnp.zeros((n, hidden), jnp.float32)
    # Python loop == fully unrolled at trace time (steps is compile-time
    # constant == 8): gives the scheduler cross-step visibility.
    for t in range(steps):
        gates = xw[t] + jnp.dot(h.astype(w_hh.dtype), w_hh,
                                preferred_element_type=jnp.float32)
        if hidden % 128 == 0:
            # Lane-aligned slabs (production H): transcendentals only where
            # needed -- sigmoid on i/f and o, tanh on g.
            sif = jax.nn.sigmoid(gates[:, 0:2 * hidden])
            i = sif[:, :hidden]
            f = sif[:, hidden:]
            g = jnp.tanh(gates[:, 2 * hidden:3 * hidden])
            o = jax.nn.sigmoid(gates[:, 3 * hidden:4 * hidden])
        else:
            # Toy / unaligned H: full-width over the (N, 4H) span is cheaper
            # than sub-vreg masked slab ops (vreg granularity).
            sig = jax.nn.sigmoid(gates)
            tnh = jnp.tanh(gates)
            i = sig[:, 0 * hidden:1 * hidden]
            f = sig[:, 1 * hidden:2 * hidden]
            g = tnh[:, 2 * hidden:3 * hidden]
            o = sig[:, 3 * hidden:4 * hidden]
        c = f * c + i * g
        h = o * jnp.tanh(c)
    return h


def _fused_forward_kernel(x_ref, n_wih_ref, n_whh_ref, n_b_ref,
                          t_wih_ref, t_whh_ref, t_b_ref,
                          d_w_ref, d_b_ref, out_ref):
    """Whole discriminator forward in one invocation (everything VMEM-resident).

    x_ref   : (OCTAVE*SEQ*B, NUM_OCTAVES*LAST_DIM) f32, row = (oct*SEQ+s)*B+b
              (octave-major == torch's transposed note-LSTM input layout).
    n_*     : note LSTM  W_ih^T (D,4H) bf16, W_hh^T (H,4H) bf16, bias (1,4H) f32
    t_*     : time LSTM  W_ih^T (H,4H) bf16, W_hh^T (H,4H) bf16, bias (1,4H) f32
    d_w_ref : (1, H) f32 dense weight row (VMEM); d_b_ref : (1,1) f32 in SMEM
    out_ref : (1, B) probabilities, lane-dense store
    """
    hidden = n_whh_ref.shape[0]
    batch = out_ref.shape[1]
    n_note = x_ref.shape[0] // OCTAVE          # = SEQ_LEN * B

    # Hoist all weight loads out of the recurrences (vreg-resident).
    n_wih = n_wih_ref[...]
    n_whh = n_whh_ref[...]
    t_wih = t_wih_ref[...]
    t_whh = t_whh_ref[...]

    # ---- note LSTM over the OCTAVE axis (batch = SEQ*B) ---------------------
    # Hoisted input projection: one wide bf16 MXU matmul + single bias add,
    # instead of T small matmuls inside the loop.
    xw = jnp.dot(x_ref[...].astype(_MXU_DTYPE), n_wih,
                 preferred_element_type=jnp.float32) + n_b_ref[...]
    xw = xw.reshape(OCTAVE, n_note, 4 * hidden)          # time-leading
    note_last = _lstm_recurrence(xw, n_whh, hidden)      # (SEQ*B, H), rows (s,b)

    # ---- time LSTM over SEQ_LEN (batch = B) ---------------------------------
    # Rows are already (s, b)-ordered -> reshape is a free view, no transpose.
    xw2 = jnp.dot(note_last.astype(_MXU_DTYPE), t_wih,
                  preferred_element_type=jnp.float32) + t_b_ref[...]
    xw2 = xw2.reshape(SEQ_LEN, batch, 4 * hidden)        # time-leading
    time_last = _lstm_recurrence(xw2, t_whh, hidden)     # (B, H)

    # ---- dense + sigmoid epilogue: lane-dense (1, B) output ------------------
    # Contract over H without materializing a transpose; d_b read from SMEM.
    logits = jax.lax.dot_general(
        d_w_ref[...], time_last,
        dimension_numbers=(((1,), (1,)), ((), ())),
        preferred_element_type=jnp.float32)              # (1, B)
    out_ref[...] = jax.nn.sigmoid(logits + d_b_ref[0, 0])


# ------------------------------ parameter init -------------------------------
def init_params(key):
    """Deterministic init mirroring PyTorch defaults: U(-1/sqrt(H), 1/sqrt(H)).

    LSTM weight matrices are stored transposed and in bf16 (single-pass MXU
    operands + halved weight DMA); biases / dense stay f32.
    """
    k = 1.0 / math.sqrt(HIDDEN)
    keys = jax.random.split(key, 10)

    def u(kk, shape):
        return jax.random.uniform(kk, shape, jnp.float32, minval=-k, maxval=k)

    return {
        # note_lstm: input NOTE_INPUT -> hidden HIDDEN
        "note_w_ih_t": u(keys[0], (NOTE_INPUT, 4 * HIDDEN)).astype(_MXU_DTYPE),
        "note_w_hh_t": u(keys[1], (HIDDEN, 4 * HIDDEN)).astype(_MXU_DTYPE),
        "note_bias": u(keys[2], (1, 4 * HIDDEN)) + u(keys[3], (1, 4 * HIDDEN)),
        # time_lstm: input HIDDEN -> hidden HIDDEN
        "time_w_ih_t": u(keys[4], (HIDDEN, 4 * HIDDEN)).astype(_MXU_DTYPE),
        "time_w_hh_t": u(keys[5], (HIDDEN, 4 * HIDDEN)).astype(_MXU_DTYPE),
        "time_bias": u(keys[6], (1, 4 * HIDDEN)) + u(keys[7], (1, 4 * HIDDEN)),
        # dense: HIDDEN -> 1
        "dense_w": u(keys[8], (1, HIDDEN)),
        "dense_b": u(keys[9], (1, 1)),
    }


# -------------------------------- forward pass --------------------------------
def featured_lstm_discriminator(params, *input_data):
    # TODO(synk): feature_generation() is not defined in the provided module;
    # treated here as identity (features = sub_data), concatenated on last dim.
    data = jnp.concatenate(list(input_data), axis=-1)
    batch_size, seq_len, notes, feature_num = data.shape
    assert feature_num == LAST_DIM
    assert seq_len == SEQ_LEN and notes == OCTAVE * NUM_OCTAVES

    # torch: .view(B,S,OCTAVE,NUM_OCT,last) -> .view(B,S,OCTAVE,D)  (octave-major
    # split of the notes axis), then .view(B*S,OCTAVE,D).transpose(0,1).
    # We additionally order the note-LSTM batch rows as (s, b): a permutation
    # of independent batch elements that lets the time-LSTM projection reshape
    # straight to (SEQ, B, 4H) inside the kernel with zero transposes.
    octv = data.reshape(batch_size, SEQ_LEN, OCTAVE, NUM_OCTAVES * LAST_DIM)
    x = jnp.transpose(octv, (2, 1, 0, 3)).reshape(
        OCTAVE * SEQ_LEN * batch_size, NUM_OCTAVES * LAST_DIM)

    vmem = pl.BlockSpec(memory_space=pltpu.MemorySpace.VMEM)
    smem = pl.BlockSpec(memory_space=pltpu.MemorySpace.SMEM)
    out = pl.pallas_call(
        _fused_forward_kernel,
        out_shape=jax.ShapeDtypeStruct((1, batch_size), jnp.float32),
        in_specs=[vmem] * 8 + [smem],
        out_specs=vmem,
        # Explicit VMEM budget with headroom: toy shapes use a few hundred KB;
        # at production hidden_size=1000 the bf16 weight set (~24 MiB) + xw
        # buffers still fit under this on v5e/v6e/v7x.
        compiler_params=pltpu.CompilerParams(vmem_limit_bytes=48 * 1024 * 1024),
    )(x,
      params["note_w_ih_t"], params["note_w_hh_t"], params["note_bias"],
      params["time_w_ih_t"], params["time_w_hh_t"], params["time_bias"],
      params["dense_w"], params["dense_b"])
    # Kernel emits lane-dense (1, B); present the module's (B, 1) shape.
    return out.reshape(batch_size, 1)


# ----------------------------------- main ------------------------------------
if __name__ == "__main__":
    key = jax.random.PRNGKey(0)
    pkey, xkey = jax.random.split(key)

    params = init_params(pkey)

    # Single sub_data input already carrying all LAST_DIM features.
    x = jax.random.normal(
        xkey, (BATCH, SEQ_LEN, OCTAVE * NUM_OCTAVES, LAST_DIM), jnp.float32)

    probs = jax.jit(featured_lstm_discriminator)(params, x)
    probs = jax.block_until_ready(probs)

    assert probs.shape == (BATCH, 1)
    assert bool(jnp.all((probs >= 0.0) & (probs <= 1.0)))
    print("KERNEL_OK")
</pallas_src>

<mosaic_0001>
module attributes {stable_mosaic.version = 11 : i64} {
  func.func @_fused_forward_kernel(%arg0: memref<128x32xf32, #tpu.memory_space<vmem>>, %arg1: memref<32x128xbf16, #tpu.memory_space<vmem>>, %arg2: memref<32x128xbf16, #tpu.memory_space<vmem>>, %arg3: memref<1x128xf32, #tpu.memory_space<vmem>>, %arg4: memref<32x128xbf16, #tpu.memory_space<vmem>>, %arg5: memref<32x128xbf16, #tpu.memory_space<vmem>>, %arg6: memref<1x128xf32, #tpu.memory_space<vmem>>, %arg7: memref<1x32xf32, #tpu.memory_space<vmem>>, %arg8: memref<1x1xf32, #tpu.memory_space<smem>>, %arg9: memref<1x2xf32, #tpu.memory_space<vmem>>) attributes {dimension_semantics = [], scalar_prefetch = 0 : i64, scratch_operands = 0 : i64, tpu.core_type = #tpu.core_type<tc>} {
    %c0 = arith.constant 0 : index
    %c0_0 = arith.constant 0 : index
    %0 = vector.load %arg1[%c0, %c0_0] : memref<32x128xbf16, #tpu.memory_space<vmem>>, vector<32x128xbf16>
    %c0_1 = arith.constant 0 : index
    %c0_2 = arith.constant 0 : index
    %1 = vector.load %arg2[%c0_1, %c0_2] : memref<32x128xbf16, #tpu.memory_space<vmem>>, vector<32x128xbf16>
    %c0_3 = arith.constant 0 : index
    %c0_4 = arith.constant 0 : index
    %2 = vector.load %arg4[%c0_3, %c0_4] : memref<32x128xbf16, #tpu.memory_space<vmem>>, vector<32x128xbf16>
    %c0_5 = arith.constant 0 : index
    %c0_6 = arith.constant 0 : index
    %3 = vector.load %arg5[%c0_5, %c0_6] : memref<32x128xbf16, #tpu.memory_space<vmem>>, vector<32x128xbf16>
    %c0_7 = arith.constant 0 : index
    %c0_8 = arith.constant 0 : index
    %4 = vector.load %arg0[%c0_7, %c0_8] : memref<128x32xf32, #tpu.memory_space<vmem>>, vector<128x32xf32>
    %5 = arith.truncf %4 : vector<128x32xf32> to vector<128x32xbf16>
    %cst = arith.constant dense<0.000000e+00> : vector<128x128xf32>
    %6 = tpu.matmul %5, %0, %cst {dimension_numbers = #tpu.dot_dimension_numbers<[1], [0], [0], [1], [0, 0, 1, 1], [], []>} : vector<128x32xbf16>, vector<32x128xbf16>, vector<128x128xf32> -> vector<128x128xf32>
    %c0_9 = arith.constant 0 : index
    %c0_10 = arith.constant 0 : index
    %7 = vector.load %arg3[%c0_9, %c0_10] : memref<1x128xf32, #tpu.memory_space<vmem>>, vector<1x128xf32>
    %8 = vector.broadcast %7 : vector<1x128xf32> to vector<128x128xf32>
    %9 = arith.addf %6, %8 : vector<128x128xf32>
    %10 = vector.shape_cast %9 : vector<128x128xf32> to vector<8x16x128xf32>
    %cst_11 = arith.constant 0.000000e+00 : f32
    %11 = vector.broadcast %cst_11 : f32 to vector<16x32xf32>
    %cst_12 = arith.constant 0.000000e+00 : f32
    %12 = vector.broadcast %cst_12 : f32 to vector<16x32xf32>
    %13 = vector.extract_strided_slice %10 {offsets = [0, 0, 0], sizes = [1, 16, 128], strides = [1, 1, 1]} : vector<8x16x128xf32> to vector<1x16x128xf32>
    %14 = vector.shape_cast %13 : vector<1x16x128xf32> to vector<16x128xf32>
    %15 = arith.truncf %11 : vector<16x32xf32> to vector<16x32xbf16>
    %cst_13 = arith.constant dense<0.000000e+00> : vector<16x128xf32>
    %16 = tpu.matmul %15, %1, %cst_13 {dimension_numbers = #tpu.dot_dimension_numbers<[1], [0], [0], [1], [0, 0, 1, 1], [], []>} : vector<16x32xbf16>, vector<32x128xbf16>, vector<16x128xf32> -> vector<16x128xf32>
    %17 = arith.addf %14, %16 : vector<16x128xf32>
    %18 = arith.negf %17 : vector<16x128xf32>
    %19 = math.exp %18 : vector<16x128xf32>
    %cst_14 = arith.constant 1.000000e+00 : f32
    %20 = vector.broadcast %cst_14 : f32 to vector<16x128xf32>
    %21 = arith.addf %20, %19 : vector<16x128xf32>
    %22 = arith.divf %20, %21 : vector<16x128xf32>
    %23 = math.tanh %17 : vector<16x128xf32>
    %24 = vector.extract_strided_slice %22 {offsets = [0, 0], sizes = [16, 32], strides = [1, 1]} : vector<16x128xf32> to vector<16x32xf32>
    %25 = vector.extract_strided_slice %22 {offsets = [0, 32], sizes = [16, 32], strides = [1, 1]} : vector<16x128xf32> to vector<16x32xf32>
    %26 = vector.extract_strided_slice %23 {offsets = [0, 64], sizes = [16, 32], strides = [1, 1]} : vector<16x128xf32> to vector<16x32xf32>
    %27 = vector.extract_strided_slice %22 {offsets = [0, 96], sizes = [16, 32], strides = [1, 1]} : vector<16x128xf32> to vector<16x32xf32>
    %28 = arith.mulf %25, %12 : vector<16x32xf32>
    %29 = arith.mulf %24, %26 : vector<16x32xf32>
    %30 = arith.addf %28, %29 : vector<16x32xf32>
    %31 = math.tanh %30 : vector<16x32xf32>
    %32 = arith.mulf %27, %31 : vector<16x32xf32>
    %33 = vector.extract_strided_slice %10 {offsets = [1, 0, 0], sizes = [1, 16, 128], strides = [1, 1, 1]} : vector<8x16x128xf32> to vector<1x16x128xf32>
    %34 = vector.shape_cast %33 : vector<1x16x128xf32> to vector<16x128xf32>
    %35 = arith.truncf %32 : vector<16x32xf32> to vector<16x32xbf16>
    %cst_15 = arith.constant dense<0.000000e+00> : vector<16x128xf32>
    %36 = tpu.matmul %35, %1, %cst_15 {dimension_numbers = #tpu.dot_dimension_numbers<[1], [0], [0], [1], [0, 0, 1, 1], [], []>} : vector<16x32xbf16>, vector<32x128xbf16>, vector<16x128xf32> -> vector<16x128xf32>
    %37 = arith.addf %34, %36 : vector<16x128xf32>
    %38 = arith.negf %37 : vector<16x128xf32>
    %39 = math.exp %38 : vector<16x128xf32>
    %cst_16 = arith.constant 1.000000e+00 : f32
    %40 = vector.broadcast %cst_16 : f32 to vector<16x128xf32>
    %41 = arith.addf %40, %39 : vector<16x128xf32>
    %42 = arith.divf %40, %41 : vector<16x128xf32>
    %43 = math.tanh %37 : vector<16x128xf32>
    %44 = vector.extract_strided_slice %42 {offsets = [0, 0], sizes = [16, 32], strides = [1, 1]} : vector<16x128xf32> to vector<16x32xf32>
    %45 = vector.extract_strided_slice %42 {offsets = [0, 32], sizes = [16, 32], strides = [1, 1]} : vector<16x128xf32> to vector<16x32xf32>
    %46 = vector.extract_strided_slice %43 {offsets = [0, 64], sizes = [16, 32], strides = [1, 1]} : vector<16x128xf32> to vector<16x32xf32>
    %47 = vector.extract_strided_slice %42 {offsets = [0, 96], sizes = [16, 32], strides = [1, 1]} : vector<16x128xf32> to vector<16x32xf32>
    %48 = arith.mulf %45, %30 : vector<16x32xf32>
    %49 = arith.mulf %44, %46 : vector<16x32xf32>
    %50 = arith.addf %48, %49 : vector<16x32xf32>
    %51 = math.tanh %50 : vector<16x32xf32>
    %52 = arith.mulf %47, %51 : vector<16x32xf32>
    %53 = vector.extract_strided_slice %10 {offsets = [2, 0, 0], sizes = [1, 16, 128], strides = [1, 1, 1]} : vector<8x16x128xf32> to vector<1x16x128xf32>
    %54 = vector.shape_cast %53 : vector<1x16x128xf32> to vector<16x128xf32>
    %55 = arith.truncf %52 : vector<16x32xf32> to vector<16x32xbf16>
    %cst_17 = arith.constant dense<0.000000e+00> : vector<16x128xf32>
    %56 = tpu.matmul %55, %1, %cst_17 {dimension_numbers = #tpu.dot_dimension_numbers<[1], [0], [0], [1], [0, 0, 1, 1], [], []>} : vector<16x32xbf16>, vector<32x128xbf16>, vector<16x128xf32> -> vector<16x128xf32>
    %57 = arith.addf %54, %56 : vector<16x128xf32>
    %58 = arith.negf %57 : vector<16x128xf32>
    %59 = math.exp %58 : vector<16x128xf32>
    %cst_18 = arith.constant 1.000000e+00 : f32
    %60 = vector.broadcast %cst_18 : f32 to vector<16x128xf32>
    %61 = arith.addf %60, %59 : vector<16x128xf32>
    %62 = arith.divf %60, %61 : vector<16x128xf32>
    %63 = math.tanh %57 : vector<16x128xf32>
    %64 = vector.extract_strided_slice %62 {offsets = [0, 0], sizes = [16, 32], strides = [1, 1]} : vector<16x128xf32> to vector<16x32xf32>
    %65 = vector.extract_strided_slice %62 {offsets = [0, 32], sizes = [16, 32], strides = [1, 1]} : vector<16x128xf32> to vector<16x32xf32>
    %66 = vector.extract_strided_slice %63 {offsets = [0, 64], sizes = [16, 32], strides = [1, 1]} : vector<16x128xf32> to vector<16x32xf32>
    %67 = vector.extract_strided_slice %62 {offsets = [0, 96], sizes = [16, 32], strides = [1, 1]} : vector<16x128xf32> to vector<16x32xf32>
    %68 = arith.mulf %65, %50 : vector<16x32xf32>
    %69 = arith.mulf %64, %66 : vector<16x32xf32>
    %70 = arith.addf %68, %69 : vector<16x32xf32>
    %71 = math.tanh %70 : vector<16x32xf32>
    %72 = arith.mulf %67, %71 : vector<16x32xf32>
    %73 = vector.extract_strided_slice %10 {offsets = [3, 0, 0], sizes = [1, 16, 128], strides = [1, 1, 1]} : vector<8x16x128xf32> to vector<1x16x128xf32>
    %74 = vector.shape_cast %73 : vector<1x16x128xf32> to vector<16x128xf32>
    %75 = arith.truncf %72 : vector<16x32xf32> to vector<16x32xbf16>
    %cst_19 = arith.constant dense<0.000000e+00> : vector<16x128xf32>
    %76 = tpu.matmul %75, %1, %cst_19 {dimension_numbers = #tpu.dot_dimension_numbers<[1], [0], [0], [1], [0, 0, 1, 1], [], []>} : vector<16x32xbf16>, vector<32x128xbf16>, vector<16x128xf32> -> vector<16x128xf32>
    %77 = arith.addf %74, %76 : vector<16x128xf32>
    %78 = arith.negf %77 : vector<16x128xf32>
    %79 = math.exp %78 : vector<16x128xf32>
    %cst_20 = arith.constant 1.000000e+00 : f32
    %80 = vector.broadcast %cst_20 : f32 to vector<16x128xf32>
    %81 = arith.addf %80, %79 : vector<16x128xf32>
    %82 = arith.divf %80, %81 : vector<16x128xf32>
    %83 = math.tanh %77 : vector<16x128xf32>
    %84 = vector.extract_strided_slice %82 {offsets = [0, 0], sizes = [16, 32], strides = [1, 1]} : vector<16x128xf32> to vector<16x32xf32>
    %85 = vector.extract_strided_slice %82 {offsets = [0, 32], sizes = [16, 32], strides = [1, 1]} : vector<16x128xf32> to vector<16x32xf32>
    %86 = vector.extract_strided_slice %83 {offsets = [0, 64], sizes = [16, 32], strides = [1, 1]} : vector<16x128xf32> to vector<16x32xf32>
    %87 = vector.extract_strided_slice %82 {offsets = [0, 96], sizes = [16, 32], strides = [1, 1]} : vector<16x128xf32> to vector<16x32xf32>
    %88 = arith.mulf %85, %70 : vector<16x32xf32>
    %89 = arith.mulf %84, %86 : vector<16x32xf32>
    %90 = arith.addf %88, %89 : vector<16x32xf32>
    %91 = math.tanh %90 : vector<16x32xf32>
    %92 = arith.mulf %87, %91 : vector<16x32xf32>
    %93 = vector.extract_strided_slice %10 {offsets = [4, 0, 0], sizes = [1, 16, 128], strides = [1, 1, 1]} : vector<8x16x128xf32> to vector<1x16x128xf32>
    %94 = vector.shape_cast %93 : vector<1x16x128xf32> to vector<16x128xf32>
    %95 = arith.truncf %92 : vector<16x32xf32> to vector<16x32xbf16>
    %cst_21 = arith.constant dense<0.000000e+00> : vector<16x128xf32>
    %96 = tpu.matmul %95, %1, %cst_21 {dimension_numbers = #tpu.dot_dimension_numbers<[1], [0], [0], [1], [0, 0, 1, 1], [], []>} : vector<16x32xbf16>, vector<32x128xbf16>, vector<16x128xf32> -> vector<16x128xf32>
    %97 = arith.addf %94, %96 : vector<16x128xf32>
    %98 = arith.negf %97 : vector<16x128xf32>
    %99 = math.exp %98 : vector<16x128xf32>
    %cst_22 = arith.constant 1.000000e+00 : f32
    %100 = vector.broadcast %cst_22 : f32 to vector<16x128xf32>
    %101 = arith.addf %100, %99 : vector<16x128xf32>
    %102 = arith.divf %100, %101 : vector<16x128xf32>
    %103 = math.tanh %97 : vector<16x128xf32>
    %104 = vector.extract_strided_slice %102 {offsets = [0, 0], sizes = [16, 32], strides = [1, 1]} : vector<16x128xf32> to vector<16x32xf32>
    %105 = vector.extract_strided_slice %102 {offsets = [0, 32], sizes = [16, 32], strides = [1, 1]} : vector<16x128xf32> to vector<16x32xf32>
    %106 = vector.extract_strided_slice %103 {offsets = [0, 64], sizes = [16, 32], strides = [1, 1]} : vector<16x128xf32> to vector<16x32xf32>
    %107 = vector.extract_strided_slice %102 {offsets = [0, 96], sizes = [16, 32], strides = [1, 1]} : vector<16x128xf32> to vector<16x32xf32>
    %108 = arith.mulf %105, %90 : vector<16x32xf32>
    %109 = arith.mulf %104, %106 : vector<16x32xf32>
    %110 = arith.addf %108, %109 : vector<16x32xf32>
    %111 = math.tanh %110 : vector<16x32xf32>
    %112 = arith.mulf %107, %111 : vector<16x32xf32>
    %113 = vector.extract_strided_slice %10 {offsets = [5, 0, 0], sizes = [1, 16, 128], strides = [1, 1, 1]} : vector<8x16x128xf32> to vector<1x16x128xf32>
    %114 = vector.shape_cast %113 : vector<1x16x128xf32> to vector<16x128xf32>
    %115 = arith.truncf %112 : vector<16x32xf32> to vector<16x32xbf16>
    %cst_23 = arith.constant dense<0.000000e+00> : vector<16x128xf32>
    %116 = tpu.matmul %115, %1, %cst_23 {dimension_numbers = #tpu.dot_dimension_numbers<[1], [0], [0], [1], [0, 0, 1, 1], [], []>} : vector<16x32xbf16>, vector<32x128xbf16>, vector<16x128xf32> -> vector<16x128xf32>
    %117 = arith.addf %114, %116 : vector<16x128xf32>
    %118 = arith.negf %117 : vector<16x128xf32>
    %119 = math.exp %118 : vector<16x128xf32>
    %cst_24 = arith.constant 1.000000e+00 : f32
    %120 = vector.broadcast %cst_24 : f32 to vector<16x128xf32>
    %121 = arith.addf %120, %119 : vector<16x128xf32>
    %122 = arith.divf %120, %121 : vector<16x128xf32>
    %123 = math.tanh %117 : vector<16x128xf32>
    %124 = vector.extract_strided_slice %122 {offsets = [0, 0], sizes = [16, 32], strides = [1, 1]} : vector<16x128xf32> to vector<16x32xf32>
    %125 = vector.extract_strided_slice %122 {offsets = [0, 32], sizes = [16, 32], strides = [1, 1]} : vector<16x128xf32> to vector<16x32xf32>
    %126 = vector.extract_strided_slice %123 {offsets = [0, 64], sizes = [16, 32], strides = [1, 1]} : vector<16x128xf32> to vector<16x32xf32>
    %127 = vector.extract_strided_slice %122 {offsets = [0, 96], sizes = [16, 32], strides = [1, 1]} : vector<16x128xf32> to vector<16x32xf32>
    %128 = arith.mulf %125, %110 : vector<16x32xf32>
    %129 = arith.mulf %124, %126 : vector<16x32xf32>
    %130 = arith.addf %128, %129 : vector<16x32xf32>
    %131 = math.tanh %130 : vector<16x32xf32>
    %132 = arith.mulf %127, %131 : vector<16x32xf32>
    %133 = vector.extract_strided_slice %10 {offsets = [6, 0, 0], sizes = [1, 16, 128], strides = [1, 1, 1]} : vector<8x16x128xf32> to vector<1x16x128xf32>
    %134 = vector.shape_cast %133 : vector<1x16x128xf32> to vector<16x128xf32>
    %135 = arith.truncf %132 : vector<16x32xf32> to vector<16x32xbf16>
    %cst_25 = arith.constant dense<0.000000e+00> : vector<16x128xf32>
    %136 = tpu.matmul %135, %1, %cst_25 {dimension_numbers = #tpu.dot_dimension_numbers<[1], [0], [0], [1], [0, 0, 1, 1], [], []>} : vector<16x32xbf16>, vector<32x128xbf16>, vector<16x128xf32> -> vector<16x128xf32>
    %137 = arith.addf %134, %136 : vector<16x128xf32>
    %138 = arith.negf %137 : vector<16x128xf32>
    %139 = math.exp %138 : vector<16x128xf32>
    %cst_26 = arith.constant 1.000000e+00 : f32
    %140 = vector.broadcast %cst_26 : f32 to vector<16x128xf32>
    %141 = arith.addf %140, %139 : vector<16x128xf32>
    %142 = arith.divf %140, %141 : vector<16x128xf32>
    %143 = math.tanh %137 : vector<16x128xf32>
    %144 = vector.extract_strided_slice %142 {offsets = [0, 0], sizes = [16, 32], strides = [1, 1]} : vector<16x128xf32> to vector<16x32xf32>
    %145 = vector.extract_strided_slice %142 {offsets = [0, 32], sizes = [16, 32], strides = [1, 1]} : vector<16x128xf32> to vector<16x32xf32>
    %146 = vector.extract_strided_slice %143 {offsets = [0, 64], sizes = [16, 32], strides = [1, 1]} : vector<16x128xf32> to vector<16x32xf32>
    %147 = vector.extract_strided_slice %142 {offsets = [0, 96], sizes = [16, 32], strides = [1, 1]} : vector<16x128xf32> to vector<16x32xf32>
    %148 = arith.mulf %145, %130 : vector<16x32xf32>
    %149 = arith.mulf %144, %146 : vector<16x32xf32>
    %150 = arith.addf %148, %149 : vector<16x32xf32>
    %151 = math.tanh %150 : vector<16x32xf32>
    %152 = arith.mulf %147, %151 : vector<16x32xf32>
    %153 = vector.extract_strided_slice %10 {offsets = [7, 0, 0], sizes = [1, 16, 128], strides = [1, 1, 1]} : vector<8x16x128xf32> to vector<1x16x128xf32>
    %154 = vector.shape_cast %153 : vector<1x16x128xf32> to vector<16x128xf32>
    %155 = arith.truncf %152 : vector<16x32xf32> to vector<16x32xbf16>
    %cst_27 = arith.constant dense<0.000000e+00> : vector<16x128xf32>
    %156 = tpu.matmul %155, %1, %cst_27 {dimension_numbers = #tpu.dot_dimension_numbers<[1], [0], [0], [1], [0, 0, 1, 1], [], []>} : vector<16x32xbf16>, vector<32x128xbf16>, vector<16x128xf32> -> vector<16x128xf32>
    %157 = arith.addf %154, %156 : vector<16x128xf32>
    %158 = arith.negf %157 : vector<16x128xf32>
    %159 = math.exp %158 : vector<16x128xf32>
    %cst_28 = arith.constant 1.000000e+00 : f32
    %160 = vector.broadcast %cst_28 : f32 to vector<16x128xf32>
    %161 = arith.addf %160, %159 : vector<16x128xf32>
    %162 = arith.divf %160, %161 : vector<16x128xf32>
    %163 = math.tanh %157 : vector<16x128xf32>
    %164 = vector.extract_strided_slice %162 {offsets = [0, 0], sizes = [16, 32], strides = [1, 1]} : vector<16x128xf32> to vector<16x32xf32>
    %165 = vector.extract_strided_slice %162 {offsets = [0, 32], sizes = [16, 32], strides = [1, 1]} : vector<16x128xf32> to vector<16x32xf32>
    %166 = vector.extract_strided_slice %163 {offsets = [0, 64], sizes = [16, 32], strides = [1, 1]} : vector<16x128xf32> to vector<16x32xf32>
    %167 = vector.extract_strided_slice %162 {offsets = [0, 96], sizes = [16, 32], strides = [1, 1]} : vector<16x128xf32> to vector<16x32xf32>
    %168 = arith.mulf %165, %150 : vector<16x32xf32>
    %169 = arith.mulf %164, %166 : vector<16x32xf32>
    %170 = arith.addf %168, %169 : vector<16x32xf32>
    %171 = math.tanh %170 : vector<16x32xf32>
    %172 = arith.mulf %167, %171 : vector<16x32xf32>
    %173 = arith.truncf %172 : vector<16x32xf32> to vector<16x32xbf16>
    %cst_29 = arith.constant dense<0.000000e+00> : vector<16x128xf32>
    %174 = tpu.matmul %173, %2, %cst_29 {dimension_numbers = #tpu.dot_dimension_numbers<[1], [0], [0], [1], [0, 0, 1, 1], [], []>} : vector<16x32xbf16>, vector<32x128xbf16>, vector<16x128xf32> -> vector<16x128xf32>
    %c0_30 = arith.constant 0 : index
    %c0_31 = arith.constant 0 : index
    %175 = vector.load %arg6[%c0_30, %c0_31] : memref<1x128xf32, #tpu.memory_space<vmem>>, vector<1x128xf32>
    %176 = vector.broadcast %175 : vector<1x128xf32> to vector<16x128xf32>
    %177 = arith.addf %174, %176 : vector<16x128xf32>
    %178 = vector.shape_cast %177 : vector<16x128xf32> to vector<8x2x128xf32>
    %cst_32 = arith.constant 0.000000e+00 : f32
    %179 = vector.broadcast %cst_32 : f32 to vector<2x32xf32>
    %cst_33 = arith.constant 0.000000e+00 : f32
    %180 = vector.broadcast %cst_33 : f32 to vector<2x32xf32>
    %181 = vector.extract_strided_slice %178 {offsets = [0, 0, 0], sizes = [1, 2, 128], strides = [1, 1, 1]} : vector<8x2x128xf32> to vector<1x2x128xf32>
    %182 = vector.shape_cast %181 : vector<1x2x128xf32> to vector<2x128xf32>
    %183 = arith.truncf %179 : vector<2x32xf32> to vector<2x32xbf16>
    %cst_34 = arith.constant dense<0.000000e+00> : vector<2x128xf32>
    %184 = tpu.matmul %183, %3, %cst_34 {dimension_numbers = #tpu.dot_dimension_numbers<[1], [0], [0], [1], [0, 0, 1, 1], [], []>} : vector<2x32xbf16>, vector<32x128xbf16>, vector<2x128xf32> -> vector<2x128xf32>
    %185 = arith.addf %182, %184 : vector<2x128xf32>
    %186 = arith.negf %185 : vector<2x128xf32>
    %187 = math.exp %186 : vector<2x128xf32>
    %cst_35 = arith.constant 1.000000e+00 : f32
    %188 = vector.broadcast %cst_35 : f32 to vector<2x128xf32>
    %189 = arith.addf %188, %187 : vector<2x128xf32>
    %190 = arith.divf %188, %189 : vector<2x128xf32>
    %191 = math.tanh %185 : vector<2x128xf32>
    %192 = vector.extract_strided_slice %190 {offsets = [0, 0], sizes = [2, 32], strides = [1, 1]} : vector<2x128xf32> to vector<2x32xf32>
    %193 = vector.extract_strided_slice %190 {offsets = [0, 32], sizes = [2, 32], strides = [1, 1]} : vector<2x128xf32> to vector<2x32xf32>
    %194 = vector.extract_strided_slice %191 {offsets = [0, 64], sizes = [2, 32], strides = [1, 1]} : vector<2x128xf32> to vector<2x32xf32>
    %195 = vector.extract_strided_slice %190 {offsets = [0, 96], sizes = [2, 32], strides = [1, 1]} : vector<2x128xf32> to vector<2x32xf32>
    %196 = arith.mulf %193, %180 : vector<2x32xf32>
    %197 = arith.mulf %192, %194 : vector<2x32xf32>
    %198 = arith.addf %196, %197 : vector<2x32xf32>
    %199 = math.tanh %198 : vector<2x32xf32>
    %200 = arith.mulf %195, %199 : vector<2x32xf32>
    %201 = vector.extract_strided_slice %178 {offsets = [1, 0, 0], sizes = [1, 2, 128], strides = [1, 1, 1]} : vector<8x2x128xf32> to vector<1x2x128xf32>
    %202 = vector.shape_cast %201 : vector<1x2x128xf32> to vector<2x128xf32>
    %203 = arith.truncf %200 : vector<2x32xf32> to vector<2x32xbf16>
    %cst_36 = arith.constant dense<0.000000e+00> : vector<2x128xf32>
    %204 = tpu.matmul %203, %3, %cst_36 {dimension_numbers = #tpu.dot_dimension_numbers<[1], [0], [0], [1], [0, 0, 1, 1], [], []>} : vector<2x32xbf16>, vector<32x128xbf16>, vector<2x128xf32> -> vector<2x128xf32>
    %205 = arith.addf %202, %204 : vector<2x128xf32>
    %206 = arith.negf %205 : vector<2x128xf32>
    %207 = math.exp %206 : vector<2x128xf32>
    %cst_37 = arith.constant 1.000000e+00 : f32
    %208 = vector.broadcast %cst_37 : f32 to vector<2x128xf32>
    %209 = arith.addf %208, %207 : vector<2x128xf32>
    %210 = arith.divf %208, %209 : vector<2x128xf32>
    %211 = math.tanh %205 : vector<2x128xf32>
    %212 = vector.extract_strided_slice %210 {offsets = [0, 0], sizes = [2, 32], strides = [1, 1]} : vector<2x128xf32> to vector<2x32xf32>
    %213 = vector.extract_strided_slice %210 {offsets = [0, 32], sizes = [2, 32], strides = [1, 1]} : vector<2x128xf32> to vector<2x32xf32>
    %214 = vector.extract_strided_slice %211 {offsets = [0, 64], sizes = [2, 32], strides = [1, 1]} : vector<2x128xf32> to vector<2x32xf32>
    %215 = vector.extract_strided_slice %210 {offsets = [0, 96], sizes = [2, 32], strides = [1, 1]} : vector<2x128xf32> to vector<2x32xf32>
    %216 = arith.mulf %213, %198 : vector<2x32xf32>
    %217 = arith.mulf %212, %214 : vector<2x32xf32>
    %218 = arith.addf %216, %217 : vector<2x32xf32>
    %219 = math.tanh %218 : vector<2x32xf32>
    %220 = arith.mulf %215, %219 : vector<2x32xf32>
    %221 = vector.extract_strided_slice %178 {offsets = [2, 0, 0], sizes = [1, 2, 128], strides = [1, 1, 1]} : vector<8x2x128xf32> to vector<1x2x128xf32>
    %222 = vector.shape_cast %221 : vector<1x2x128xf32> to vector<2x128xf32>
    %223 = arith.truncf %220 : vector<2x32xf32> to vector<2x32xbf16>
    %cst_38 = arith.constant dense<0.000000e+00> : vector<2x128xf32>
    %224 = tpu.matmul %223, %3, %cst_38 {dimension_numbers = #tpu.dot_dimension_numbers<[1], [0], [0], [1], [0, 0, 1, 1], [], []>} : vector<2x32xbf16>, vector<32x128xbf16>, vector<2x128xf32> -> vector<2x128xf32>
    %225 = arith.addf %222, %224 : vector<2x128xf32>
    %226 = arith.negf %225 : vector<2x128xf32>
    %227 = math.exp %226 : vector<2x128xf32>
    %cst_39 = arith.constant 1.000000e+00 : f32
    %228 = vector.broadcast %cst_39 : f32 to vector<2x128xf32>
    %229 = arith.addf %228, %227 : vector<2x128xf32>
    %230 = arith.divf %228, %229 : vector<2x128xf32>
    %231 = math.tanh %225 : vector<2x128xf32>
    %232 = vector.extract_strided_slice %230 {offsets = [0, 0], sizes = [2, 32], strides = [1, 1]} : vector<2x128xf32> to vector<2x32xf32>
    %233 = vector.extract_strided_slice %230 {offsets = [0, 32], sizes = [2, 32], strides = [1, 1]} : vector<2x128xf32> to vector<2x32xf32>
    %234 = vector.extract_strided_slice %231 {offsets = [0, 64], sizes = [2, 32], strides = [1, 1]} : vector<2x128xf32> to vector<2x32xf32>
    %235 = vector.extract_strided_slice %230 {offsets = [0, 96], sizes = [2, 32], strides = [1, 1]} : vector<2x128xf32> to vector<2x32xf32>
    %236 = arith.mulf %233, %218 : vector<2x32xf32>
    %237 = arith.mulf %232, %234 : vector<2x32xf32>
    %238 = arith.addf %236, %237 : vector<2x32xf32>
    %239 = math.tanh %238 : vector<2x32xf32>
    %240 = arith.mulf %235, %239 : vector<2x32xf32>
    %241 = vector.extract_strided_slice %178 {offsets = [3, 0, 0], sizes = [1, 2, 128], strides = [1, 1, 1]} : vector<8x2x128xf32> to vector<1x2x128xf32>
    %242 = vector.shape_cast %241 : vector<1x2x128xf32> to vector<2x128xf32>
    %243 = arith.truncf %240 : vector<2x32xf32> to vector<2x32xbf16>
    %cst_40 = arith.constant dense<0.000000e+00> : vector<2x128xf32>
    %244 = tpu.matmul %243, %3, %cst_40 {dimension_numbers = #tpu.dot_dimension_numbers<[1], [0], [0], [1], [0, 0, 1, 1], [], []>} : vector<2x32xbf16>, vector<32x128xbf16>, vector<2x128xf32> -> vector<2x128xf32>
    %245 = arith.addf %242, %244 : vector<2x128xf32>
    %246 = arith.negf %245 : vector<2x128xf32>
    %247 = math.exp %246 : vector<2x128xf32>
    %cst_41 = arith.constant 1.000000e+00 : f32
    %248 = vector.broadcast %cst_41 : f32 to vector<2x128xf32>
    %249 = arith.addf %248, %247 : vector<2x128xf32>
    %250 = arith.divf %248, %249 : vector<2x128xf32>
    %251 = math.tanh %245 : vector<2x128xf32>
    %252 = vector.extract_strided_slice %250 {offsets = [0, 0], sizes = [2, 32], strides = [1, 1]} : vector<2x128xf32> to vector<2x32xf32>
    %253 = vector.extract_strided_slice %250 {offsets = [0, 32], sizes = [2, 32], strides = [1, 1]} : vector<2x128xf32> to vector<2x32xf32>
    %254 = vector.extract_strided_slice %251 {offsets = [0, 64], sizes = [2, 32], strides = [1, 1]} : vector<2x128xf32> to vector<2x32xf32>
    %255 = vector.extract_strided_slice %250 {offsets = [0, 96], sizes = [2, 32], strides = [1, 1]} : vector<2x128xf32> to vector<2x32xf32>
    %256 = arith.mulf %253, %238 : vector<2x32xf32>
    %257 = arith.mulf %252, %254 : vector<2x32xf32>
    %258 = arith.addf %256, %257 : vector<2x32xf32>
    %259 = math.tanh %258 : vector<2x32xf32>
    %260 = arith.mulf %255, %259 : vector<2x32xf32>
    %261 = vector.extract_strided_slice %178 {offsets = [4, 0, 0], sizes = [1, 2, 128], strides = [1, 1, 1]} : vector<8x2x128xf32> to vector<1x2x128xf32>
    %262 = vector.shape_cast %261 : vector<1x2x128xf32> to vector<2x128xf32>
    %263 = arith.truncf %260 : vector<2x32xf32> to vector<2x32xbf16>
    %cst_42 = arith.constant dense<0.000000e+00> : vector<2x128xf32>
    %264 = tpu.matmul %263, %3, %cst_42 {dimension_numbers = #tpu.dot_dimension_numbers<[1], [0], [0], [1], [0, 0, 1, 1], [], []>} : vector<2x32xbf16>, vector<32x128xbf16>, vector<2x128xf32> -> vector<2x128xf32>
    %265 = arith.addf %262, %264 : vector<2x128xf32>
    %266 = arith.negf %265 : vector<2x128xf32>
    %267 = math.exp %266 : vector<2x128xf32>
    %cst_43 = arith.constant 1.000000e+00 : f32
    %268 = vector.broadcast %cst_43 : f32 to vector<2x128xf32>
    %269 = arith.addf %268, %267 : vector<2x128xf32>
    %270 = arith.divf %268, %269 : vector<2x128xf32>
    %271 = math.tanh %265 : vector<2x128xf32>
    %272 = vector.extract_strided_slice %270 {offsets = [0, 0], sizes = [2, 32], strides = [1, 1]} : vector<2x128xf32> to vector<2x32xf32>
    %273 = vector.extract_strided_slice %270 {offsets = [0, 32], sizes = [2, 32], strides = [1, 1]} : vector<2x128xf32> to vector<2x32xf32>
    %274 = vector.extract_strided_slice %271 {offsets = [0, 64], sizes = [2, 32], strides = [1, 1]} : vector<2x128xf32> to vector<2x32xf32>
    %275 = vector.extract_strided_slice %270 {offsets = [0, 96], sizes = [2, 32], strides = [1, 1]} : vector<2x128xf32> to vector<2x32xf32>
    %276 = arith.mulf %273, %258 : vector<2x32xf32>
    %277 = arith.mulf %272, %274 : vector<2x32xf32>
    %278 = arith.addf %276, %277 : vector<2x32xf32>
    %279 = math.tanh %278 : vector<2x32xf32>
    %280 = arith.mulf %275, %279 : vector<2x32xf32>
    %281 = vector.extract_strided_slice %178 {offsets = [5, 0, 0], sizes = [1, 2, 128], strides = [1, 1, 1]} : vector<8x2x128xf32> to vector<1x2x128xf32>
    %282 = vector.shape_cast %281 : vector<1x2x128xf32> to vector<2x128xf32>
    %283 = arith.truncf %280 : vector<2x32xf32> to vector<2x32xbf16>
    %cst_44 = arith.constant dense<0.000000e+00> : vector<2x128xf32>
    %284 = tpu.matmul %283, %3, %cst_44 {dimension_numbers = #tpu.dot_dimension_numbers<[1], [0], [0], [1], [0, 0, 1, 1], [], []>} : vector<2x32xbf16>, vector<32x128xbf16>, vector<2x128xf32> -> vector<2x128xf32>
    %285 = arith.addf %282, %284 : vector<2x128xf32>
    %286 = arith.negf %285 : vector<2x128xf32>
    %287 = math.exp %286 : vector<2x128xf32>
    %cst_45 = arith.constant 1.000000e+00 : f32
    %288 = vector.broadcast %cst_45 : f32 to vector<2x128xf32>
    %289 = arith.addf %288, %287 : vector<2x128xf32>
    %290 = arith.divf %288, %289 : vector<2x128xf32>
    %291 = math.tanh %285 : vector<2x128xf32>
    %292 = vector.extract_strided_slice %290 {offsets = [0, 0], sizes = [2, 32], strides = [1, 1]} : vector<2x128xf32> to vector<2x32xf32>
    %293 = vector.extract_strided_slice %290 {offsets = [0, 32], sizes = [2, 32], strides = [1, 1]} : vector<2x128xf32> to vector<2x32xf32>
    %294 = vector.extract_strided_slice %291 {offsets = [0, 64], sizes = [2, 32], strides = [1, 1]} : vector<2x128xf32> to vector<2x32xf32>
    %295 = vector.extract_strided_slice %290 {offsets = [0, 96], sizes = [2, 32], strides = [1, 1]} : vector<2x128xf32> to vector<2x32xf32>
    %296 = arith.mulf %293, %278 : vector<2x32xf32>
    %297 = arith.mulf %292, %294 : vector<2x32xf32>
    %298 = arith.addf %296, %297 : vector<2x32xf32>
    %299 = math.tanh %298 : vector<2x32xf32>
    %300 = arith.mulf %295, %299 : vector<2x32xf32>
    %301 = vector.extract_strided_slice %178 {offsets = [6, 0, 0], sizes = [1, 2, 128], strides = [1, 1, 1]} : vector<8x2x128xf32> to vector<1x2x128xf32>
    %302 = vector.shape_cast %301 : vector<1x2x128xf32> to vector<2x128xf32>
    %303 = arith.truncf %300 : vector<2x32xf32> to vector<2x32xbf16>
    %cst_46 = arith.constant dense<0.000000e+00> : vector<2x128xf32>
    %304 = tpu.matmul %303, %3, %cst_46 {dimension_numbers = #tpu.dot_dimension_numbers<[1], [0], [0], [1], [0, 0, 1, 1], [], []>} : vector<2x32xbf16>, vector<32x128xbf16>, vector<2x128xf32> -> vector<2x128xf32>
    %305 = arith.addf %302, %304 : vector<2x128xf32>
    %306 = arith.negf %305 : vector<2x128xf32>
    %307 = math.exp %306 : vector<2x128xf32>
    %cst_47 = arith.constant 1.000000e+00 : f32
    %308 = vector.broadcast %cst_47 : f32 to vector<2x128xf32>
    %309 = arith.addf %308, %307 : vector<2x128xf32>
    %310 = arith.divf %308, %309 : vector<2x128xf32>
    %311 = math.tanh %305 : vector<2x128xf32>
    %312 = vector.extract_strided_slice %310 {offsets = [0, 0], sizes = [2, 32], strides = [1, 1]} : vector<2x128xf32> to vector<2x32xf32>
    %313 = vector.extract_strided_slice %310 {offsets = [0, 32], sizes = [2, 32], strides = [1, 1]} : vector<2x128xf32> to vector<2x32xf32>
    %314 = vector.extract_strided_slice %311 {offsets = [0, 64], sizes = [2, 32], strides = [1, 1]} : vector<2x128xf32> to vector<2x32xf32>
    %315 = vector.extract_strided_slice %310 {offsets = [0, 96], sizes = [2, 32], strides = [1, 1]} : vector<2x128xf32> to vector<2x32xf32>
    %316 = arith.mulf %313, %298 : vector<2x32xf32>
    %317 = arith.mulf %312, %314 : vector<2x32xf32>
    %318 = arith.addf %316, %317 : vector<2x32xf32>
    %319 = math.tanh %318 : vector<2x32xf32>
    %320 = arith.mulf %315, %319 : vector<2x32xf32>
    %321 = vector.extract_strided_slice %178 {offsets = [7, 0, 0], sizes = [1, 2, 128], strides = [1, 1, 1]} : vector<8x2x128xf32> to vector<1x2x128xf32>
    %322 = vector.shape_cast %321 : vector<1x2x128xf32> to vector<2x128xf32>
    %323 = arith.truncf %320 : vector<2x32xf32> to vector<2x32xbf16>
    %cst_48 = arith.constant dense<0.000000e+00> : vector<2x128xf32>
    %324 = tpu.matmul %323, %3, %cst_48 {dimension_numbers = #tpu.dot_dimension_numbers<[1], [0], [0], [1], [0, 0, 1, 1], [], []>} : vector<2x32xbf16>, vector<32x128xbf16>, vector<2x128xf32> -> vector<2x128xf32>
    %325 = arith.addf %322, %324 : vector<2x128xf32>
    %326 = arith.negf %325 : vector<2x128xf32>
    %327 = math.exp %326 : vector<2x128xf32>
    %cst_49 = arith.constant 1.000000e+00 : f32
    %328 = vector.broadcast %cst_49 : f32 to vector<2x128xf32>
    %329 = arith.addf %328, %327 : vector<2x128xf32>
    %330 = arith.divf %328, %329 : vector<2x128xf32>
    %331 = math.tanh %325 : vector<2x128xf32>
    %332 = vector.extract_strided_slice %330 {offsets = [0, 0], sizes = [2, 32], strides = [1, 1]} : vector<2x128xf32> to vector<2x32xf32>
    %333 = vector.extract_strided_slice %330 {offsets = [0, 32], sizes = [2, 32], strides = [1, 1]} : vector<2x128xf32> to vector<2x32xf32>
    %334 = vector.extract_strided_slice %331 {offsets = [0, 64], sizes = [2, 32], strides = [1, 1]} : vector<2x128xf32> to vector<2x32xf32>
    %335 = vector.extract_strided_slice %330 {offsets = [0, 96], sizes = [2, 32], strides = [1, 1]} : vector<2x128xf32> to vector<2x32xf32>
    %336 = arith.mulf %333, %318 : vector<2x32xf32>
    %337 = arith.mulf %332, %334 : vector<2x32xf32>
    %338 = arith.addf %336, %337 : vector<2x32xf32>
    %339 = math.tanh %338 : vector<2x32xf32>
    %340 = arith.mulf %335, %339 : vector<2x32xf32>
    %c0_50 = arith.constant 0 : index
    %c0_51 = arith.constant 0 : index
    %341 = vector.load %arg7[%c0_50, %c0_51] : memref<1x32xf32, #tpu.memory_space<vmem>>, vector<1x32xf32>
    %cst_52 = arith.constant dense<0.000000e+00> : vector<1x2xf32>
    %342 = tpu.matmul %341, %340, %cst_52 {dimension_numbers = #tpu.dot_dimension_numbers<[1], [1], [0], [0], [0, 0, 1, 0], [], []>} : vector<1x32xf32>, vector<2x32xf32>, vector<1x2xf32> -> vector<1x2xf32>
    %c0_53 = arith.constant 0 : index
    %c0_54 = arith.constant 0 : index
    %343 = memref.load %arg8[%c0_53, %c0_54] : memref<1x1xf32, #tpu.memory_space<smem>>
    %344 = vector.broadcast %343 : f32 to vector<1x2xf32>
    %345 = arith.addf %342, %344 : vector<1x2xf32>
    %346 = arith.negf %345 : vector<1x2xf32>
    %347 = math.exp %346 : vector<1x2xf32>
    %cst_55 = arith.constant 1.000000e+00 : f32
    %348 = vector.broadcast %cst_55 : f32 to vector<1x2xf32>
    %349 = arith.addf %348, %347 : vector<1x2xf32>
    %350 = arith.divf %348, %349 : vector<1x2xf32>
    %c0_56 = arith.constant 0 : index
    %c0_57 = arith.constant 0 : index
    %351 = vector.load %arg9[%c0_56, %c0_57] : memref<1x2xf32, #tpu.memory_space<vmem>>, vector<1x2xf32>
    tpu.vector_store %arg9[%c0_56, %c0_57], %350 {strides = array<i32>} : memref<1x2xf32, #tpu.memory_space<vmem>>, vector<1x2xf32>,
    return
  }
}

</mosaic_0001>

<llo_original>
// kernel: featured_lstm_discriminator.1
$region0: #{featured_lstm_discriminator.1}
  #allocation0 [shape = 'u32[]', space=smem, size = 0x4, offset = 0x4, fixed_abs, tag = 'smem constant byte address 0x4 - core index']
  #allocation1 [shape = 'u32[144,128]{1,0:T(1,128)}', space=vmem, size = 0x12000, scoped, tag = 'internal scratch']
  #allocation2 [shape = 'f32[1,1]{1,0:T(1,128)S(6)}', space=smem, size = 0x200, scoped, tag = 'scoped memory for featured_lstm_discriminator.1']
  %s0 = inlined_call_operand.vmem [shape: f32[128,32], index: 0, kind: input, shape index: {}]
  %s1 = inlined_call_operand.vmem [shape: bf16[32,128], index: 1, kind: input, shape index: {}]
  %s2 = inlined_call_operand.vmem [shape: bf16[32,128], index: 2, kind: input, shape index: {}]
  %s3 = inlined_call_operand.vmem [shape: f32[1,128], index: 3, kind: input, shape index: {}]
  %s4 = inlined_call_operand.vmem [shape: bf16[32,128], index: 4, kind: input, shape index: {}]
  %s5 = inlined_call_operand.vmem [shape: bf16[32,128], index: 5, kind: input, shape index: {}]
  %s6 = inlined_call_operand.vmem [shape: f32[1,128], index: 6, kind: input, shape index: {}]
  %s7 = inlined_call_operand.vmem [shape: f32[1,32], index: 7, kind: input, shape index: {}]
  %s8 = inlined_call_operand.<no memory space> [shape: f32[1,1], index: 8, kind: input, shape index: {}]
  %s9 = inlined_call_operand.hbm [shape: f32[1,2], index: 9, kind: output, shape index: {}]
  %s10 = sld [smem:[#allocation0]]
  $region46: #{featured_lstm_discriminator.1} parent=0
    _
  %s12 = ssub.s32 1, %s10
  %s13 = scalar_select 0, %s12, %s10
  %14 = sst [smem:[#allocation2]] %s8
  $region1: #{featured_lstm_discriminator.1} parent=0
    #allocation3 [shape = 'u8[512]{0}', space=vmem, size = 0x400, scoped, tag = 'output window, operand 0, single buffered']
    #allocation4 [shape = 's32[1]{0}', space=sflag, size = 0x4, scoped, tag = 'scoped memory for featured_lstm_discriminator.1']
    %15 = vsyncpa [#allocation4], 0
    // Predicated region
    $region2: #{featured_lstm_discriminator.1} parent=1 // pred_check
      _
    $region3: #{featured_lstm_discriminator.1} parent=1 // pred_check_branch
      %17 = sbr.rel (0) target = $region5
    $region4: #{featured_lstm_discriminator.1} parent=1 // pred_region
      _
    $region5: #{featured_lstm_discriminator.1} parent=1 // pred_fallthru
      _
    // Predicated region
    $region6: #{featured_lstm_discriminator.1} parent=1 // pred_check
      _
    $region7: #{featured_lstm_discriminator.1} parent=1 // pred_check_branch
      %19 = sbr.rel (0) target = $region9
    $region8: #{featured_lstm_discriminator.1} parent=1 // pred_region
      _
    $region9: #{featured_lstm_discriminator.1} parent=1 // pred_fallthru
      _
    // Predicated region
    $region10: #{featured_lstm_discriminator.1} parent=1 // pred_check
      _
    $region11: #{featured_lstm_discriminator.1} parent=1 // pred_check_branch
      %21 = sbr.rel (0) target = $region13
    $region12: #{featured_lstm_discriminator.1} parent=1 // pred_region
      _
    $region13: #{featured_lstm_discriminator.1} parent=1 // pred_fallthru
      _
    // Predicated region
    $region14: #{featured_lstm_discriminator.1} parent=1 // pred_check
      _
    $region15: #{featured_lstm_discriminator.1} parent=1 // pred_check_branch
      %23 = sbr.rel (0) target = $region17
    $region16: #{featured_lstm_discriminator.1} parent=1 // pred_region
      _
    $region17: #{featured_lstm_discriminator.1} parent=1 // pred_fallthru
      _
    // Predicated region
    $region18: #{featured_lstm_discriminator.1} parent=1 // pred_check
      _
    $region19: #{featured_lstm_discriminator.1} parent=1 // pred_check_branch
      %25 = sbr.rel (0) target = $region21
    $region20: #{featured_lstm_discriminator.1} parent=1 // pred_region
      _
    $region21: #{featured_lstm_discriminator.1} parent=1 // pred_fallthru
      _
    // Predicated region
    $region22: #{featured_lstm_discriminator.1} parent=1 // pred_check
      _
    $region23: #{featured_lstm_discriminator.1} parent=1 // pred_check_branch
      %27 = sbr.rel (0) target = $region25
    $region24: #{featured_lstm_discriminator.1} parent=1 // pred_region
      _
    $region25: #{featured_lstm_discriminator.1} parent=1 // pred_fallthru
      _
    // Predicated region
    $region26: #{featured_lstm_discriminator.1} parent=1 // pred_check
      _
    $region27: #{featured_lstm_discriminator.1} parent=1 // pred_check_branch
      %29 = sbr.rel (0) target = $region29
    $region28: #{featured_lstm_discriminator.1} parent=1 // pred_region
      _
    $region29: #{featured_lstm_discriminator.1} parent=1 // pred_fallthru
      _
    // Predicated region
    $region30: #{featured_lstm_discriminator.1} parent=1 // pred_check
      _
    $region31: #{featured_lstm_discriminator.1} parent=1 // pred_check_branch
      %31 = sbr.rel (0) target = $region33
    $region32: #{featured_lstm_discriminator.1} parent=1 // pred_region
      _
    $region33: #{featured_lstm_discriminator.1} parent=1 // pred_fallthru
      _
    // Predicated region
    $region34: #{featured_lstm_discriminator.1} parent=1 // pred_check
      _
    $region35: #{featured_lstm_discriminator.1} parent=1 // pred_check_branch
      %33 = sbr.rel (0) target = $region37
    $region36: #{featured_lstm_discriminator.1} parent=1 // pred_region
      _
    $region37: #{featured_lstm_discriminator.1} parent=1 // pred_fallthru
      _
    %v35 = vld [vmem:[%s1] sm:$0xf]
    %v36 = vld [vmem:[%s1 + $0x4] sm:$0xf]
    %v37 = vld [vmem:[%s1 + $0x8] sm:$0xf]
    %v38 = vld [vmem:[%s1 + $0xc] sm:$0xf]
    %v39 = vld [vmem:[%s2] sm:$0xf]
    %v40 = vld [vmem:[%s2 + $0x4] sm:$0xf]
    %v41 = vld [vmem:[%s2 + $0x8] sm:$0xf]
    %v42 = vld [vmem:[%s2 + $0xc] sm:$0xf]
    %v43 = vld [vmem:[%s4] sm:$0xf]
    %v44 = vld [vmem:[%s4 + $0x4] sm:$0xf]
    %v45 = vld [vmem:[%s4 + $0x8] sm:$0xf]
    %v46 = vld [vmem:[%s4 + $0xc] sm:$0xf]
    %v47 = vld [vmem:[%s5] sm:$0xf]
    %v48 = vld [vmem:[%s5 + $0x4] sm:$0xf]
    %v49 = vld [vmem:[%s5 + $0x8] sm:$0xf]
    %v50 = vld [vmem:[%s5 + $0xc] sm:$0xf]
    %v51 = vld [vmem:[%s0] sm:$0xff]
    %v52 = vld [vmem:[%s0 + $0x8] sm:$0xff]
    %v53 = vld [vmem:[%s0 + $0x10] sm:$0xff]
    %v54 = vld [vmem:[%s0 + $0x18] sm:$0xff]
    %v55 = vld [vmem:[%s0 + $0x20] sm:$0xff]
    %v56 = vld [vmem:[%s0 + $0x28] sm:$0xff]
    %v57 = vld [vmem:[%s0 + $0x30] sm:$0xff]
    %v58 = vld [vmem:[%s0 + $0x38] sm:$0xff]
    %v59 = vld [vmem:[%s0 + $0x40] sm:$0xff]
    %v60 = vld [vmem:[%s0 + $0x48] sm:$0xff]
    %v61 = vld [vmem:[%s0 + $0x50] sm:$0xff]
    %v62 = vld [vmem:[%s0 + $0x58] sm:$0xff]
    %v63 = vld [vmem:[%s0 + $0x60] sm:$0xff]
    %v64 = vld [vmem:[%s0 + $0x68] sm:$0xff]
    %v65 = vld [vmem:[%s0 + $0x70] sm:$0xff]
    %v66 = vld [vmem:[%s0 + $0x78] sm:$0xff]
    %v67 = vpack.c.bf16 %v52, %v51
    %v68 = vpack.c.bf16 %v54, %v53
    %v69 = vpack.c.bf16 %v56, %v55
    %v70 = vpack.c.bf16 %v58, %v57
    %v71 = vpack.c.bf16 %v60, %v59
    %v72 = vpack.c.bf16 %v62, %v61
    %v73 = vpack.c.bf16 %v64, %v63
    %v74 = vpack.c.bf16 %v66, %v65
    %v75 = vld [vmem:[%s3] sm:$0x1]
    %v77 = vlaneseq
    %v78 = vshrl.u32 %v77, 7
    %v79 = vsub.s32 0, %v78
    %v80 = vrot.slane %v75, %v79
    %v86 = vunpack.c.l.b16 %v35
    %v87 = vunpack.c.l.b16 %v36
    %v88 = vunpack.c.l.b16 %v37
    %v89 = vunpack.c.l.b16 %v38
    %v90 = vpack.c.b16 %v87, %v86
    %v91 = vpack.c.b16 %v89, %v88
    %vm94 = vcmask 261120
    %v96 = vsel %vm94, %v67, 0
    %v99 = vsel %vm94, %v68, 0
    %v102 = vsel %vm94, %v69, 0
    %v105 = vsel %vm94, %v70, 0
    %v108 = vsel %vm94, %v71, 0
    %v111 = vsel %vm94, %v72, 0
    %v114 = vsel %vm94, %v73, 0
    %v117 = vsel %vm94, %v74, 0
    %119 = vmatprep.subr.bf16.mxu0 0
    %120 = vmatpush1.bf16.msra.mxu0 0
    %121 = vmatprep.subr.bf16.mxu0 0
    %122 = vmatpush1.bf16.msra.mxu0 0
    %123 = vmatprep.subr.bf16.mxu0 0
    %124 = vmatpush1.bf16.msra.mxu0 0
    %125 = vmatprep.subr.bf16.mxu0 0
    %126 = vmatpush1.bf16.msra.mxu0 0
    %127 = vmatprep.subr.bf16.mxu0 0
    %128 = vmatpush1.bf16.msra.mxu0 0
    %129 = vmatprep.subr.bf16.mxu0 0
    %130 = vmatpush1.bf16.msra.mxu0 0
    %131 = vmatprep.subr.bf16.mxu0 0
    %132 = vmatpush1.bf16.msra.mxu0 %v91
    %133 = vmatprep.subr.bf16.mxu0 0
    %134 = vmatpush1.bf16.msra.mxu0 %v90
    %135 = vmatprep.subr.bf16.mxu0 0
    %136 = vmatpush2.bf16.msra.mxu0 0
    %137 = vmatprep.subr.bf16.mxu0 0
    %138 = vmatpush2.bf16.msra.mxu0 0
    %139 = vmatprep.subr.bf16.mxu0 0
    %140 = vmatpush2.bf16.msra.mxu0 0
    %141 = vmatprep.subr.bf16.mxu0 0
    %142 = vmatpush2.bf16.msra.mxu0 0
    %143 = vmatprep.subr.bf16.mxu0 0
    %144 = vmatpush2.bf16.msra.mxu0 0
    %145 = vmatprep.subr.bf16.mxu0 0
    %146 = vmatpush2.bf16.msra.mxu0 0
    %147 = vmatprep.subr.bf16.mxu0 0
    %148 = vmatpush2.bf16.msra.mxu0 0
    %149 = vmatprep.subr.bf16.mxu0 0
    %150 = vmatpush2.bf16.msra.mxu0 0
    %151 = vmatprep.mubr.bf16.mxu0 0
    %152 = vmatmul.mubr.bf16.gmra.mxu0 %v96
    %v153 = vpop.f32.mrf.mxu0
    %v154 = vadd.f32 %v80, %v153
    %v155 = vpop.f32.mrf.mxu0
    %v156 = vpop.f32.mrf.mxu0
    %v157 = vadd.f32 %v80, %v156
    %v158 = vpop.f32.mrf.mxu0
    %159 = vmatprep.mubr.bf16.mxu0 0
    %160 = vmatmul.mubr.bf16.gmra.mxu0 %v99
    %v161 = vpop.f32.mrf.mxu0
    %v162 = vadd.f32 %v80, %v161
    %v163 = vpop.f32.mrf.mxu0
    %v164 = vpop.f32.mrf.mxu0
    %v165 = vadd.f32 %v80, %v164
    %v166 = vpop.f32.mrf.mxu0
    %167 = vmatprep.mubr.bf16.mxu0 0
    %168 = vmatmul.mubr.bf16.gmra.mxu0 %v102
    %v169 = vpop.f32.mrf.mxu0
    %v170 = vadd.f32 %v80, %v169
    %v171 = vpop.f32.mrf.mxu0
    %v172 = vpop.f32.mrf.mxu0
    %v173 = vadd.f32 %v80, %v172
    %v174 = vpop.f32.mrf.mxu0
    %175 = vmatprep.mubr.bf16.mxu0 0
    %176 = vmatmul.mubr.bf16.gmra.mxu0 %v105
    %v177 = vpop.f32.mrf.mxu0
    %v178 = vadd.f32 %v80, %v177
    %v179 = vpop.f32.mrf.mxu0
    %v180 = vpop.f32.mrf.mxu0
    %v181 = vadd.f32 %v80, %v180
    %v182 = vpop.f32.mrf.mxu0
    %183 = vmatprep.mubr.bf16.mxu0 0
    %184 = vmatmul.mubr.bf16.gmra.mxu0 %v108
    %v185 = vpop.f32.mrf.mxu0
    %v186 = vadd.f32 %v80, %v185
    %v187 = vpop.f32.mrf.mxu0
    %v188 = vpop.f32.mrf.mxu0
    %v189 = vadd.f32 %v80, %v188
    %v190 = vpop.f32.mrf.mxu0
    %191 = vmatprep.mubr.bf16.mxu0 0
    %192 = vmatmul.mubr.bf16.gmra.mxu0 %v111
    %v193 = vpop.f32.mrf.mxu0
    %v194 = vadd.f32 %v80, %v193
    %v195 = vpop.f32.mrf.mxu0
    %v196 = vpop.f32.mrf.mxu0
    %v197 = vadd.f32 %v80, %v196
    %v198 = vpop.f32.mrf.mxu0
    %199 = vmatprep.mubr.bf16.mxu0 0
    %200 = vmatmul.mubr.bf16.gmra.mxu0 %v114
    %v201 = vpop.f32.mrf.mxu0
    %v202 = vadd.f32 %v80, %v201
    %v203 = vpop.f32.mrf.mxu0
    %v204 = vpop.f32.mrf.mxu0
    %v205 = vadd.f32 %v80, %v204
    %v206 = vpop.f32.mrf.mxu0
    %207 = vmatprep.mubr.bf16.mxu0 0
    %208 = vmatmul.mubr.bf16.gmra.mxu0 %v117
    %v209 = vpop.f32.mrf.mxu0
    %v210 = vadd.f32 %v80, %v209
    %v211 = vpop.f32.mrf.mxu0
    %v212 = vpop.f32.mrf.mxu0
    %v213 = vadd.f32 %v80, %v212
    %v214 = vpop.f32.mrf.mxu0
    %215 = vdwg.mxu0
    %v220 = vunpack.c.l.b16 %v39
    %v221 = vunpack.c.l.b16 %v40
    %v222 = vunpack.c.l.b16 %v41
    %v223 = vunpack.c.l.b16 %v42
    %v224 = vpack.c.b16 %v221, %v220
    %v225 = vpack.c.b16 %v223, %v222
    %v229 = vsel %vm94, 0, 0
    %231 = vmatprep.subr.bf16.mxu0 0
    %232 = vmatpush1.bf16.msra.mxu0 0
    %233 = vmatprep.subr.bf16.mxu0 0
    %234 = vmatpush1.bf16.msra.mxu0 0
    %235 = vmatprep.subr.bf16.mxu0 0
    %236 = vmatpush1.bf16.msra.mxu0 0
    %237 = vmatprep.subr.bf16.mxu0 0
    %238 = vmatpush1.bf16.msra.mxu0 0
    %239 = vmatprep.subr.bf16.mxu0 0
    %240 = vmatpush1.bf16.msra.mxu0 0
    %241 = vmatprep.subr.bf16.mxu0 0
    %242 = vmatpush1.bf16.msra.mxu0 0
    %243 = vmatprep.subr.bf16.mxu0 0
    %244 = vmatpush1.bf16.msra.mxu0 %v225
    %245 = vmatprep.subr.bf16.mxu0 0
    %246 = vmatpush1.bf16.msra.mxu0 %v224
    %247 = vmatprep.subr.bf16.mxu0 0
    %248 = vmatpush2.bf16.msra.mxu0 0
    %249 = vmatprep.subr.bf16.mxu0 0
    %250 = vmatpush2.bf16.msra.mxu0 0
    %251 = vmatprep.subr.bf16.mxu0 0
    %252 = vmatpush2.bf16.msra.mxu0 0
    %253 = vmatprep.subr.bf16.mxu0 0
    %254 = vmatpush2.bf16.msra.mxu0 0
    %255 = vmatprep.subr.bf16.mxu0 0
    %256 = vmatpush2.bf16.msra.mxu0 0
    %257 = vmatprep.subr.bf16.mxu0 0
    %258 = vmatpush2.bf16.msra.mxu0 0
    %259 = vmatprep.subr.bf16.mxu0 0
    %260 = vmatpush2.bf16.msra.mxu0 0
    %261 = vmatprep.subr.bf16.mxu0 0
    %262 = vmatpush2.bf16.msra.mxu0 0
    %263 = vmatprep.mubr.bf16.mxu0 0
    %264 = vmatmul.mubr.bf16.gmra.mxu0 %v229
    %v265 = vpop.f32.mrf.mxu0
    %v266 = vadd.f32 0.0, %v265
    %v267 = vpop.f32.mrf.mxu0
    %v268 = vpop.f32.mrf.mxu0
    %v269 = vadd.f32 0.0, %v268
    %v270 = vpop.f32.mrf.mxu0
    %271 = vdwg.mxu0
    %v272 = vadd.f32 %v154, %v266
    %v273 = vadd.f32 %v157, %v269
    %v274 = vxor.u32 %v272, 2147483648
    %v275 = vxor.u32 %v273, 2147483648
    %v276 = vmul.f32 %v274, 1.442695
    %v277 = vpow.pop %v276
    %v278 = vmul.f32 %v275, 1.442695
    %v279 = vpow.pop %v278
    %v280 = vadd.f32 %v277, 1.0
    %v281 = vadd.f32 %v279, 1.0
    %v282 = vrcp.pop %v280
    %v283 = vmul.f32 1.0, %v282
    %v284 = vrcp.pop %v281
    %v285 = vmul.f32 1.0, %v284
    %v286 = vtanh.pop %v272
    %v287 = vtanh.pop %v273
    %v288 = vmul.f32 %v283, 0.0
    %v289 = vmul.f32 %v285, 0.0
    %292 = vrot.lane.b32.xlu0 %v286, 64
    %v293 = vpop.permute.xlu0 %292
    %294 = vrot.lane.b32.xlu0 %v287, 64
    %v295 = vpop.permute.xlu0 %294
    %v298 = vmul.f32 %v283, %v293
    %v299 = vmul.f32 %v285, %v295
    %302 = vrot.lane.b32.xlu0 %v298, 32
    %v303 = vpop.permute.xlu0 %302
    %304 = vrot.lane.b32.xlu0 %v299, 32
    %v305 = vpop.permute.xlu0 %304
    %v308 = vadd.f32 %v288, %v303
    %v309 = vadd.f32 %v289, %v305
    %v310 = vtanh.pop %v308
    %v311 = vtanh.pop %v309
    %314 = vrot.lane.b32.xlu0 %v310, 64
    %v315 = vpop.permute.xlu0 %314
    %316 = vrot.lane.b32.xlu0 %v311, 64
    %v317 = vpop.permute.xlu0 %316
    %v320 = vmul.f32 %v283, %v315
    %v321 = vmul.f32 %v285, %v317
    %v322 = vpack.c.bf16 %v321, %v320
    %324 = vrot.lane.b32.xlu0 %v322, 32
    %v325 = vpop.permute.xlu0 %324
    %v327 = vsel %vm94, %v325, 0
    %329 = vmatprep.subr.bf16.mxu0 0
    %330 = vmatpush1.bf16.msra.mxu0 0
    %331 = vmatprep.subr.bf16.mxu0 0
    %332 = vmatpush1.bf16.msra.mxu0 0
    %333 = vmatprep.subr.bf16.mxu0 0
    %334 = vmatpush1.bf16.msra.mxu0 0
    %335 = vmatprep.subr.bf16.mxu0 0
    %336 = vmatpush1.bf16.msra.mxu0 0
    %337 = vmatprep.subr.bf16.mxu0 0
    %338 = vmatpush1.bf16.msra.mxu0 0
    %339 = vmatprep.subr.bf16.mxu0 0
    %340 = vmatpush1.bf16.msra.mxu0 0
    %341 = vmatprep.subr.bf16.mxu0 0
    %342 = vmatpush1.bf16.msra.mxu0 %v225
    %343 = vmatprep.subr.bf16.mxu0 0
    %344 = vmatpush1.bf16.msra.mxu0 %v224
    %345 = vmatprep.subr.bf16.mxu0 0
    %346 = vmatpush2.bf16.msra.mxu0 0
    %347 = vmatprep.subr.bf16.mxu0 0
    %348 = vmatpush2.bf16.msra.mxu0 0
    %349 = vmatprep.subr.bf16.mxu0 0
    %350 = vmatpush2.bf16.msra.mxu0 0
    %351 = vmatprep.subr.bf16.mxu0 0
    %352 = vmatpush2.bf16.msra.mxu0 0
    %353 = vmatprep.subr.bf16.mxu0 0
    %354 = vmatpush2.bf16.msra.mxu0 0
    %355 = vmatprep.subr.bf16.mxu0 0
    %356 = vmatpush2.bf16.msra.mxu0 0
    %357 = vmatprep.subr.bf16.mxu0 0
    %358 = vmatpush2.bf16.msra.mxu0 0
    %359 = vmatprep.subr.bf16.mxu0 0
    %360 = vmatpush2.bf16.msra.mxu0 0
    %361 = vmatprep.mubr.bf16.mxu0 0
    %362 = vmatmul.mubr.bf16.gmra.mxu0 %v327
    %v363 = vpop.f32.mrf.mxu0
    %v364 = vadd.f32 0.0, %v363
    %v365 = vpop.f32.mrf.mxu0
    %v366 = vpop.f32.mrf.mxu0
    %v367 = vadd.f32 0.0, %v366
    %v368 = vpop.f32.mrf.mxu0
    %369 = vdwg.mxu0
    %v370 = vadd.f32 %v162, %v364
    %v371 = vadd.f32 %v165, %v367
    %v372 = vxor.u32 %v370, 2147483648
    %v373 = vxor.u32 %v371, 2147483648
    %v374 = vmul.f32 %v372, 1.442695
    %v375 = vpow.pop %v374
    %v376 = vmul.f32 %v373, 1.442695
    %v377 = vpow.pop %v376
    %v378 = vadd.f32 %v375, 1.0
    %v379 = vadd.f32 %v377, 1.0
    %v380 = vrcp.pop %v378
    %v381 = vmul.f32 1.0, %v380
    %v382 = vrcp.pop %v379
    %v383 = vmul.f32 1.0, %v382
    %v384 = vtanh.pop %v370
    %v385 = vtanh.pop %v371
    %v386 = vmul.f32 %v381, %v308
    %v387 = vmul.f32 %v383, %v309
    %390 = vrot.lane.b32.xlu0 %v384, 64
    %v391 = vpop.permute.xlu0 %390
    %392 = vrot.lane.b32.xlu0 %v385, 64
    %v393 = vpop.permute.xlu0 %392
    %v396 = vmul.f32 %v381, %v391
    %v397 = vmul.f32 %v383, %v393
    %400 = vrot.lane.b32.xlu0 %v396, 32
    %v401 = vpop.permute.xlu0 %400
    %402 = vrot.lane.b32.xlu0 %v397, 32
    %v403 = vpop.permute.xlu0 %402
    %v406 = vadd.f32 %v386, %v401
    %v407 = vadd.f32 %v387, %v403
    %v408 = vtanh.pop %v406
    %v409 = vtanh.pop %v407
    %412 = vrot.lane.b32.xlu0 %v408, 64
    %v413 = vpop.permute.xlu0 %412
    %414 = vrot.lane.b32.xlu0 %v409, 64
    %v415 = vpop.permute.xlu0 %414
    %v418 = vmul.f32 %v381, %v413
    %v419 = vmul.f32 %v383, %v415
    %v420 = vpack.c.bf16 %v419, %v418
    %422 = vrot.lane.b32.xlu0 %v420, 32
    %v423 = vpop.permute.xlu0 %422
    %v425 = vsel %vm94, %v423, 0
    %427 = vmatprep.subr.bf16.mxu0 0
    %428 = vmatpush1.bf16.msra.mxu0 0
    %429 = vmatprep.subr.bf16.mxu0 0
    %430 = vmatpush1.bf16.msra.mxu0 0
    %431 = vmatprep.subr.bf16.mxu0 0
    %432 = vmatpush1.bf16.msra.mxu0 0
    %433 = vmatprep.subr.bf16.mxu0 0
    %434 = vmatpush1.bf16.msra.mxu0 0
    %435 = vmatprep.subr.bf16.mxu0 0
    %436 = vmatpush1.bf16.msra.mxu0 0
    %437 = vmatprep.subr.bf16.mxu0 0
    %438 = vmatpush1.bf16.msra.mxu0 0
    %439 = vmatprep.subr.bf16.mxu0 0
    %440 = vmatpush1.bf16.msra.mxu0 %v225
    %441 = vmatprep.subr.bf16.mxu0 0
    %442 = vmatpush1.bf16.msra.mxu0 %v224
    %443 = vmatprep.subr.bf16.mxu0 0
    %444 = vmatpush2.bf16.msra.mxu0 0
    %445 = vmatprep.subr.bf16.mxu0 0
    %446 = vmatpush2.bf16.msra.mxu0 0
    %447 = vmatprep.subr.bf16.mxu0 0
    %448 = vmatpush2.bf16.msra.mxu0 0
    %449 = vmatprep.subr.bf16.mxu0 0
    %450 = vmatpush2.bf16.msra.mxu0 0
    %451 = vmatprep.subr.bf16.mxu0 0
    %452 = vmatpush2.bf16.msra.mxu0 0
    %453 = vmatprep.subr.bf16.mxu0 0
    %454 = vmatpush2.bf16.msra.mxu0 0
    %455 = vmatprep.subr.bf16.mxu0 0
    %456 = vmatpush2.bf16.msra.mxu0 0
    %457 = vmatprep.subr.bf16.mxu0 0
    %458 = vmatpush2.bf16.msra.mxu0 0
    %459 = vmatprep.mubr.bf16.mxu0 0
    %460 = vmatmul.mubr.bf16.gmra.mxu0 %v425
    %v461 = vpop.f32.mrf.mxu0
    %v462 = vadd.f32 0.0, %v461
    %v463 = vpop.f32.mrf.mxu0
    %v464 = vpop.f32.mrf.mxu0
    %v465 = vadd.f32 0.0, %v464
    %v466 = vpop.f32.mrf.mxu0
    %467 = vdwg.mxu0
    %v468 = vadd.f32 %v170, %v462
    %v469 = vadd.f32 %v173, %v465
    %v470 = vxor.u32 %v468, 2147483648
    %v471 = vxor.u32 %v469, 2147483648
    %v472 = vmul.f32 %v470, 1.442695
    %v473 = vpow.pop %v472
    %v474 = vmul.f32 %v471, 1.442695
    %v475 = vpow.pop %v474
    %v476 = vadd.f32 %v473, 1.0
    %v477 = vadd.f32 %v475, 1.0
    %v478 = vrcp.pop %v476
    %v479 = vmul.f32 1.0, %v478
    %v480 = vrcp.pop %v477
    %v481 = vmul.f32 1.0, %v480
    %v482 = vtanh.pop %v468
    %v483 = vtanh.pop %v469
    %v484 = vmul.f32 %v479, %v406
    %v485 = vmul.f32 %v481, %v407
    %488 = vrot.lane.b32.xlu0 %v482, 64
    %v489 = vpop.permute.xlu0 %488
    %490 = vrot.lane.b32.xlu0 %v483, 64
    %v491 = vpop.permute.xlu0 %490
    %v494 = vmul.f32 %v479, %v489
    %v495 = vmul.f32 %v481, %v491
    %498 = vrot.lane.b32.xlu0 %v494, 32
    %v499 = vpop.permute.xlu0 %498
    %500 = vrot.lane.b32.xlu0 %v495, 32
    %v501 = vpop.permute.xlu0 %500
    %v504 = vadd.f32 %v484, %v499
    %v505 = vadd.f32 %v485, %v501
    %v506 = vtanh.pop %v504
    %v507 = vtanh.pop %v505
    %510 = vrot.lane.b32.xlu0 %v506, 64
    %v511 = vpop.permute.xlu0 %510
    %512 = vrot.lane.b32.xlu0 %v507, 64
    %v513 = vpop.permute.xlu0 %512
    %v516 = vmul.f32 %v479, %v511
    %v517 = vmul.f32 %v481, %v513
    %v518 = vpack.c.bf16 %v517, %v516
    %520 = vrot.lane.b32.xlu0 %v518, 32
    %v521 = vpop.permute.xlu0 %520
    %v523 = vsel %vm94, %v521, 0
    %525 = vmatprep.subr.bf16.mxu0 0
    %526 = vmatpush1.bf16.msra.mxu0 0
    %527 = vmatprep.subr.bf16.mxu0 0
    %528 = vmatpush1.bf16.msra.mxu0 0
    %529 = vmatprep.subr.bf16.mxu0 0
    %530 = vmatpush1.bf16.msra.mxu0 0
    %531 = vmatprep.subr.bf16.mxu0 0
    %532 = vmatpush1.bf16.msra.mxu0 0
    %533 = vmatprep.subr.bf16.mxu0 0
    %534 = vmatpush1.bf16.msra.mxu0 0
    %535 = vmatprep.subr.bf16.mxu0 0
    %536 = vmatpush1.bf16.msra.mxu0 0
    %537 = vmatprep.subr.bf16.mxu0 0
    %538 = vmatpush1.bf16.msra.mxu0 %v225
    %539 = vmatprep.subr.bf16.mxu0 0
    %540 = vmatpush1.bf16.msra.mxu0 %v224
    %541 = vmatprep.subr.bf16.mxu0 0
    %542 = vmatpush2.bf16.msra.mxu0 0
    %543 = vmatprep.subr.bf16.mxu0 0
    %544 = vmatpush2.bf16.msra.mxu0 0
    %545 = vmatprep.subr.bf16.mxu0 0
    %546 = vmatpush2.bf16.msra.mxu0 0
    %547 = vmatprep.subr.bf16.mxu0 0
    %548 = vmatpush2.bf16.msra.mxu0 0
    %549 = vmatprep.subr.bf16.mxu0 0
    %550 = vmatpush2.bf16.msra.mxu0 0
    %551 = vmatprep.subr.bf16.mxu0 0
    %552 = vmatpush2.bf16.msra.mxu0 0
    %553 = vmatprep.subr.bf16.mxu0 0
    %554 = vmatpush2.bf16.msra.mxu0 0
    %555 = vmatprep.subr.bf16.mxu0 0
    %556 = vmatpush2.bf16.msra.mxu0 0
    %557 = vmatprep.mubr.bf16.mxu0 0
    %558 = vmatmul.mubr.bf16.gmra.mxu0 %v523
    %v559 = vpop.f32.mrf.mxu0
    %v560 = vadd.f32 0.0, %v559
    %v561 = vpop.f32.mrf.mxu0
    %v562 = vpop.f32.mrf.mxu0
    %v563 = vadd.f32 0.0, %v562
    %v564 = vpop.f32.mrf.mxu0
    %565 = vdwg.mxu0
    %v566 = vadd.f32 %v178, %v560
    %v567 = vadd.f32 %v181, %v563
    %v568 = vxor.u32 %v566, 2147483648
    %v569 = vxor.u32 %v567, 2147483648
    %v570 = vmul.f32 %v568, 1.442695
    %v571 = vpow.pop %v570
    %v572 = vmul.f32 %v569, 1.442695
    %v573 = vpow.pop %v572
    %v574 = vadd.f32 %v571, 1.0
    %v575 = vadd.f32 %v573, 1.0
    %v576 = vrcp.pop %v574
    %v577 = vmul.f32 1.0, %v576
    %v578 = vrcp.pop %v575
    %v579 = vmul.f32 1.0, %v578
    %v580 = vtanh.pop %v566
    %v581 = vtanh.pop %v567
    %v582 = vmul.f32 %v577, %v504
    %v583 = vmul.f32 %v579, %v505
    %586 = vrot.lane.b32.xlu0 %v580, 64
    %v587 = vpop.permute.xlu0 %586
    %588 = vrot.lane.b32.xlu0 %v581, 64
    %v589 = vpop.permute.xlu0 %588
    %v592 = vmul.f32 %v577, %v587
    %v593 = vmul.f32 %v579, %v589
    %596 = vrot.lane.b32.xlu0 %v592, 32
    %v597 = vpop.permute.xlu0 %596
    %598 = vrot.lane.b32.xlu0 %v593, 32
    %v599 = vpop.permute.xlu0 %598
    %v602 = vadd.f32 %v582, %v597
    %v603 = vadd.f32 %v583, %v599
    %v604 = vtanh.pop %v602
    %v605 = vtanh.pop %v603
    %608 = vrot.lane.b32.xlu0 %v604, 64
    %v609 = vpop.permute.xlu0 %608
    %610 = vrot.lane.b32.xlu0 %v605, 64
    %v611 = vpop.permute.xlu0 %610
    %v614 = vmul.f32 %v577, %v609
    %v615 = vmul.f32 %v579, %v611
    %v616 = vpack.c.bf16 %v615, %v614
    %618 = vrot.lane.b32.xlu0 %v616, 32
    %v619 = vpop.permute.xlu0 %618
    %v621 = vsel %vm94, %v619, 0
    %623 = vmatprep.subr.bf16.mxu0 0
    %624 = vmatpush1.bf16.msra.mxu0 0
    %625 = vmatprep.subr.bf16.mxu0 0
    %626 = vmatpush1.bf16.msra.mxu0 0
    %627 = vmatprep.subr.bf16.mxu0 0
    %628 = vmatpush1.bf16.msra.mxu0 0
    %629 = vmatprep.subr.bf16.mxu0 0
    %630 = vmatpush1.bf16.msra.mxu0 0
    %631 = vmatprep.subr.bf16.mxu0 0
    %632 = vmatpush1.bf16.msra.mxu0 0
    %633 = vmatprep.subr.bf16.mxu0 0
    %634 = vmatpush1.bf16.msra.mxu0 0
    %635 = vmatprep.subr.bf16.mxu0 0
    %636 = vmatpush1.bf16.msra.mxu0 %v225
    %637 = vmatprep.subr.bf16.mxu0 0
    %638 = vmatpush1.bf16.msra.mxu0 %v224
    %639 = vmatprep.subr.bf16.mxu0 0
    %640 = vmatpush2.bf16.msra.mxu0 0
    %641 = vmatprep.subr.bf16.mxu0 0
    %642 = vmatpush2.bf16.msra.mxu0 0
    %643 = vmatprep.subr.bf16.mxu0 0
    %644 = vmatpush2.bf16.msra.mxu0 0
    %645 = vmatprep.subr.bf16.mxu0 0
    %646 = vmatpush2.bf16.msra.mxu0 0
    %647 = vmatprep.subr.bf16.mxu0 0
    %648 = vmatpush2.bf16.msra.mxu0 0
    %649 = vmatprep.subr.bf16.mxu0 0
    %650 = vmatpush2.bf16.msra.mxu0 0
    %651 = vmatprep.subr.bf16.mxu0 0
    %652 = vmatpush2.bf16.msra.mxu0 0
    %653 = vmatprep.subr.bf16.mxu0 0
    %654 = vmatpush2.bf16.msra.mxu0 0
    %655 = vmatprep.mubr.bf16.mxu0 0
    %656 = vmatmul.mubr.bf16.gmra.mxu0 %v621
    %v657 = vpop.f32.mrf.mxu0
    %v658 = vadd.f32 0.0, %v657
    %v659 = vpop.f32.mrf.mxu0
    %v660 = vpop.f32.mrf.mxu0
    %v661 = vadd.f32 0.0, %v660
    %v662 = vpop.f32.mrf.mxu0
    %663 = vdwg.mxu0
    %v664 = vadd.f32 %v186, %v658
    %v665 = vadd.f32 %v189, %v661
    %v666 = vxor.u32 %v664, 2147483648
    %v667 = vxor.u32 %v665, 2147483648
    %v668 = vmul.f32 %v666, 1.442695
    %v669 = vpow.pop %v668
    %v670 = vmul.f32 %v667, 1.442695
    %v671 = vpow.pop %v670
    %v672 = vadd.f32 %v669, 1.0
    %v673 = vadd.f32 %v671, 1.0
    %v674 = vrcp.pop %v672
    %v675 = vmul.f32 1.0, %v674
    %v676 = vrcp.pop %v673
    %v677 = vmul.f32 1.0, %v676
    %v678 = vtanh.pop %v664
    %v679 = vtanh.pop %v665
    %v680 = vmul.f32 %v675, %v602
    %v681 = vmul.f32 %v677, %v603
    %684 = vrot.lane.b32.xlu0 %v678, 64
    %v685 = vpop.permute.xlu0 %684
    %686 = vrot.lane.b32.xlu0 %v679, 64
    %v687 = vpop.permute.xlu0 %686
    %v690 = vmul.f32 %v675, %v685
    %v691 = vmul.f32 %v677, %v687
    %694 = vrot.lane.b32.xlu0 %v690, 32
    %v695 = vpop.permute.xlu0 %694
    %696 = vrot.lane.b32.xlu0 %v691, 32
    %v697 = vpop.permute.xlu0 %696
    %v700 = vadd.f32 %v680, %v695
    %v701 = vadd.f32 %v681, %v697
    %v702 = vtanh.pop %v700
    %v703 = vtanh.pop %v701
    %706 = vrot.lane.b32.xlu0 %v702, 64
    %v707 = vpop.permute.xlu0 %706
    %708 = vrot.lane.b32.xlu0 %v703, 64
    %v709 = vpop.permute.xlu0 %708
    %v712 = vmul.f32 %v675, %v707
    %v713 = vmul.f32 %v677, %v709
    %v714 = vpack.c.bf16 %v713, %v712
    %716 = vrot.lane.b32.xlu0 %v714, 32
    %v717 = vpop.permute.xlu0 %716
    %v719 = vsel %vm94, %v717, 0
    %721 = vmatprep.subr.bf16.mxu0 0
    %722 = vmatpush1.bf16.msra.mxu0 0
    %723 = vmatprep.subr.bf16.mxu0 0
    %724 = vmatpush1.bf16.msra.mxu0 0
    %725 = vmatprep.subr.bf16.mxu0 0
    %726 = vmatpush1.bf16.msra.mxu0 0
    %727 = vmatprep.subr.bf16.mxu0 0
    %728 = vmatpush1.bf16.msra.mxu0 0
    %729 = vmatprep.subr.bf16.mxu0 0
    %730 = vmatpush1.bf16.msra.mxu0 0
    %731 = vmatprep.subr.bf16.mxu0 0
    %732 = vmatpush1.bf16.msra.mxu0 0
    %733 = vmatprep.subr.bf16.mxu0 0
    %734 = vmatpush1.bf16.msra.mxu0 %v225
    %735 = vmatprep.subr.bf16.mxu0 0
    %736 = vmatpush1.bf16.msra.mxu0 %v224
    %737 = vmatprep.subr.bf16.mxu0 0
    %738 = vmatpush2.bf16.msra.mxu0 0
    %739 = vmatprep.subr.bf16.mxu0 0
    %740 = vmatpush2.bf16.msra.mxu0 0
    %741 = vmatprep.subr.bf16.mxu0 0
    %742 = vmatpush2.bf16.msra.mxu0 0
    %743 = vmatprep.subr.bf16.mxu0 0
    %744 = vmatpush2.bf16.msra.mxu0 0
    %745 = vmatprep.subr.bf16.mxu0 0
    %746 = vmatpush2.bf16.msra.mxu0 0
    %747 = vmatprep.subr.bf16.mxu0 0
    %748 = vmatpush2.bf16.msra.mxu0 0
    %749 = vmatprep.subr.bf16.mxu0 0
    %750 = vmatpush2.bf16.msra.mxu0 0
    %751 = vmatprep.subr.bf16.mxu0 0
    %752 = vmatpush2.bf16.msra.mxu0 0
    %753 = vmatprep.mubr.bf16.mxu0 0
    %754 = vmatmul.mubr.bf16.gmra.mxu0 %v719
    %v755 = vpop.f32.mrf.mxu0
    %v756 = vadd.f32 0.0, %v755
    %v757 = vpop.f32.mrf.mxu0
    %v758 = vpop.f32.mrf.mxu0
    %v759 = vadd.f32 0.0, %v758
    %v760 = vpop.f32.mrf.mxu0
    %761 = vdwg.mxu0
    %v762 = vadd.f32 %v194, %v756
    %v763 = vadd.f32 %v197, %v759
    %v764 = vxor.u32 %v762, 2147483648
    %v765 = vxor.u32 %v763, 2147483648
    %v766 = vmul.f32 %v764, 1.442695
    %v767 = vpow.pop %v766
    %v768 = vmul.f32 %v765, 1.442695
    %v769 = vpow.pop %v768
    %v770 = vadd.f32 %v767, 1.0
    %v771 = vadd.f32 %v769, 1.0
    %v772 = vrcp.pop %v770
    %v773 = vmul.f32 1.0, %v772
    %v774 = vrcp.pop %v771
    %v775 = vmul.f32 1.0, %v774
    %v776 = vtanh.pop %v762
    %v777 = vtanh.pop %v763
    %v778 = vmul.f32 %v773, %v700
    %v779 = vmul.f32 %v775, %v701
    %782 = vrot.lane.b32.xlu0 %v776, 64
    %v783 = vpop.permute.xlu0 %782
    %784 = vrot.lane.b32.xlu0 %v777, 64
    %v785 = vpop.permute.xlu0 %784
    %v788 = vmul.f32 %v773, %v783
    %v789 = vmul.f32 %v775, %v785
    %792 = vrot.lane.b32.xlu0 %v788, 32
    %v793 = vpop.permute.xlu0 %792
    %794 = vrot.lane.b32.xlu0 %v789, 32
    %v795 = vpop.permute.xlu0 %794
    %v798 = vadd.f32 %v778, %v793
    %v799 = vadd.f32 %v779, %v795
    %v800 = vtanh.pop %v798
    %v801 = vtanh.pop %v799
    %804 = vrot.lane.b32.xlu0 %v800, 64
    %v805 = vpop.permute.xlu0 %804
    %806 = vrot.lane.b32.xlu0 %v801, 64
    %v807 = vpop.permute.xlu0 %806
    %v810 = vmul.f32 %v773, %v805
    %v811 = vmul.f32 %v775, %v807
    %v812 = vpack.c.bf16 %v811, %v810
    %814 = vrot.lane.b32.xlu0 %v812, 32
    %v815 = vpop.permute.xlu0 %814
    %v817 = vsel %vm94, %v815, 0
    %819 = vmatprep.subr.bf16.mxu0 0
    %820 = vmatpush1.bf16.msra.mxu0 0
    %821 = vmatprep.subr.bf16.mxu0 0
    %822 = vmatpush1.bf16.msra.mxu0 0
    %823 = vmatprep.subr.bf16.mxu0 0
    %824 = vmatpush1.bf16.msra.mxu0 0
    %825 = vmatprep.subr.bf16.mxu0 0
    %826 = vmatpush1.bf16.msra.mxu0 0
    %827 = vmatprep.subr.bf16.mxu0 0
    %828 = vmatpush1.bf16.msra.mxu0 0
    %829 = vmatprep.subr.bf16.mxu0 0
    %830 = vmatpush1.bf16.msra.mxu0 0
    %831 = vmatprep.subr.bf16.mxu0 0
    %832 = vmatpush1.bf16.msra.mxu0 %v225
    %833 = vmatprep.subr.bf16.mxu0 0
    %834 = vmatpush1.bf16.msra.mxu0 %v224
    %835 = vmatprep.subr.bf16.mxu0 0
    %836 = vmatpush2.bf16.msra.mxu0 0
    %837 = vmatprep.subr.bf16.mxu0 0
    %838 = vmatpush2.bf16.msra.mxu0 0
    %839 = vmatprep.subr.bf16.mxu0 0
    %840 = vmatpush2.bf16.msra.mxu0 0
    %841 = vmatprep.subr.bf16.mxu0 0
    %842 = vmatpush2.bf16.msra.mxu0 0
    %843 = vmatprep.subr.bf16.mxu0 0
    %844 = vmatpush2.bf16.msra.mxu0 0
    %845 = vmatprep.subr.bf16.mxu0 0
    %846 = vmatpush2.bf16.msra.mxu0 0
    %847 = vmatprep.subr.bf16.mxu0 0
    %848 = vmatpush2.bf16.msra.mxu0 0
    %849 = vmatprep.subr.bf16.mxu0 0
    %850 = vmatpush2.bf16.msra.mxu0 0
    %851 = vmatprep.mubr.bf16.mxu0 0
    %852 = vmatmul.mubr.bf16.gmra.mxu0 %v817
    %v853 = vpop.f32.mrf.mxu0
    %v854 = vadd.f32 0.0, %v853
    %v855 = vpop.f32.mrf.mxu0
    %v856 = vpop.f32.mrf.mxu0
    %v857 = vadd.f32 0.0, %v856
    %v858 = vpop.f32.mrf.mxu0
    %859 = vdwg.mxu0
    %v860 = vadd.f32 %v202, %v854
    %v861 = vadd.f32 %v205, %v857
    %v862 = vxor.u32 %v860, 2147483648
    %v863 = vxor.u32 %v861, 2147483648
    %v864 = vmul.f32 %v862, 1.442695
    %v865 = vpow.pop %v864
    %v866 = vmul.f32 %v863, 1.442695
    %v867 = vpow.pop %v866
    %v868 = vadd.f32 %v865, 1.0
    %v869 = vadd.f32 %v867, 1.0
    %v870 = vrcp.pop %v868
    %v871 = vmul.f32 1.0, %v870
    %v872 = vrcp.pop %v869
    %v873 = vmul.f32 1.0, %v872
    %v874 = vtanh.pop %v860
    %v875 = vtanh.pop %v861
    %v876 = vmul.f32 %v871, %v798
    %v877 = vmul.f32 %v873, %v799
    %880 = vrot.lane.b32.xlu0 %v874, 64
    %v881 = vpop.permute.xlu0 %880
    %882 = vrot.lane.b32.xlu0 %v875, 64
    %v883 = vpop.permute.xlu0 %882
    %v886 = vmul.f32 %v871, %v881
    %v887 = vmul.f32 %v873, %v883
    %890 = vrot.lane.b32.xlu0 %v886, 32
    %v891 = vpop.permute.xlu0 %890
    %892 = vrot.lane.b32.xlu0 %v887, 32
    %v893 = vpop.permute.xlu0 %892
    %v896 = vadd.f32 %v876, %v891
    %v897 = vadd.f32 %v877, %v893
    %v898 = vtanh.pop %v896
    %v899 = vtanh.pop %v897
    %902 = vrot.lane.b32.xlu0 %v898, 64
    %v903 = vpop.permute.xlu0 %902
    %904 = vrot.lane.b32.xlu0 %v899, 64
    %v905 = vpop.permute.xlu0 %904
    %v908 = vmul.f32 %v871, %v903
    %v909 = vmul.f32 %v873, %v905
    %v910 = vpack.c.bf16 %v909, %v908
    %912 = vrot.lane.b32.xlu0 %v910, 32
    %v913 = vpop.permute.xlu0 %912
    %v915 = vsel %vm94, %v913, 0
    %917 = vmatprep.subr.bf16.mxu0 0
    %918 = vmatpush1.bf16.msra.mxu0 0
    %919 = vmatprep.subr.bf16.mxu0 0
    %920 = vmatpush1.bf16.msra.mxu0 0
    %921 = vmatprep.subr.bf16.mxu0 0
    %922 = vmatpush1.bf16.msra.mxu0 0
    %923 = vmatprep.subr.bf16.mxu0 0
    %924 = vmatpush1.bf16.msra.mxu0 0
    %925 = vmatprep.subr.bf16.mxu0 0
    %926 = vmatpush1.bf16.msra.mxu0 0
    %927 = vmatprep.subr.bf16.mxu0 0
    %928 = vmatpush1.bf16.msra.mxu0 0
    %929 = vmatprep.subr.bf16.mxu0 0
    %930 = vmatpush1.bf16.msra.mxu0 %v225
    %931 = vmatprep.subr.bf16.mxu0 0
    %932 = vmatpush1.bf16.msra.mxu0 %v224
    %933 = vmatprep.subr.bf16.mxu0 0
    %934 = vmatpush2.bf16.msra.mxu0 0
    %935 = vmatprep.subr.bf16.mxu0 0
    %936 = vmatpush2.bf16.msra.mxu0 0
    %937 = vmatprep.subr.bf16.mxu0 0
    %938 = vmatpush2.bf16.msra.mxu0 0
    %939 = vmatprep.subr.bf16.mxu0 0
    %940 = vmatpush2.bf16.msra.mxu0 0
    %941 = vmatprep.subr.bf16.mxu0 0
    %942 = vmatpush2.bf16.msra.mxu0 0
    %943 = vmatprep.subr.bf16.mxu0 0
    %944 = vmatpush2.bf16.msra.mxu0 0
    %945 = vmatprep.subr.bf16.mxu0 0
    %946 = vmatpush2.bf16.msra.mxu0 0
    %947 = vmatprep.subr.bf16.mxu0 0
    %948 = vmatpush2.bf16.msra.mxu0 0
    %949 = vmatprep.mubr.bf16.mxu0 0
    %950 = vmatmul.mubr.bf16.gmra.mxu0 %v915
    %v951 = vpop.f32.mrf.mxu0
    %v952 = vadd.f32 0.0, %v951
    %v953 = vpop.f32.mrf.mxu0
    %v954 = vpop.f32.mrf.mxu0
    %v955 = vadd.f32 0.0, %v954
    %v956 = vpop.f32.mrf.mxu0
    %957 = vdwg.mxu0
    %v958 = vadd.f32 %v210, %v952
    %v959 = vadd.f32 %v213, %v955
    %v960 = vxor.u32 %v958, 2147483648
    %v961 = vxor.u32 %v959, 2147483648
    %v962 = vmul.f32 %v960, 1.442695
    %v963 = vpow.pop %v962
    %v964 = vmul.f32 %v961, 1.442695
    %v965 = vpow.pop %v964
    %v966 = vadd.f32 %v963, 1.0
    %v967 = vadd.f32 %v965, 1.0
    %v968 = vrcp.pop %v966
    %v969 = vmul.f32 1.0, %v968
    %v970 = vrcp.pop %v967
    %v971 = vmul.f32 1.0, %v970
    %v972 = vtanh.pop %v958
    %v973 = vtanh.pop %v959
    %v974 = vmul.f32 %v969, %v896
    %v975 = vmul.f32 %v971, %v897
    %978 = vrot.lane.b32.xlu0 %v972, 64
    %v979 = vpop.permute.xlu0 %978
    %980 = vrot.lane.b32.xlu0 %v973, 64
    %v981 = vpop.permute.xlu0 %980
    %v984 = vmul.f32 %v969, %v979
    %v985 = vmul.f32 %v971, %v981
    %988 = vrot.lane.b32.xlu0 %v984, 32
    %v989 = vpop.permute.xlu0 %988
    %990 = vrot.lane.b32.xlu0 %v985, 32
    %v991 = vpop.permute.xlu0 %990
    %v994 = vadd.f32 %v974, %v989
    %v995 = vadd.f32 %v975, %v991
    %v996 = vtanh.pop %v994
    %v997 = vtanh.pop %v995
    %1000 = vrot.lane.b32.xlu0 %v996, 64
    %v1001 = vpop.permute.xlu0 %1000
    %1002 = vrot.lane.b32.xlu0 %v997, 64
    %v1003 = vpop.permute.xlu0 %1002
    %v1006 = vmul.f32 %v969, %v1001
    %v1007 = vmul.f32 %v971, %v1003
    %v1008 = vpack.c.bf16 %v1007, %v1006
    %v1009 = vld [vmem:[%s6] sm:$0x1]
    %v1011 = vlaneseq
    %v1012 = vshrl.u32 %v1011, 7
    %v1013 = vsub.s32 0, %v1012
    %v1014 = vrot.slane %v1009, %v1013
    %1017 = vrot.lane.b32.xlu0 %v1008, 32
    %v1018 = vpop.permute.xlu0 %1017
    %v1023 = vunpack.c.l.b16 %v43
    %v1024 = vunpack.c.l.b16 %v44
    %v1025 = vunpack.c.l.b16 %v45
    %v1026 = vunpack.c.l.b16 %v46
    %v1027 = vpack.c.b16 %v1024, %v1023
    %v1028 = vpack.c.b16 %v1026, %v1025
    %v1032 = vsel %vm94, %v1018, 0
    %1034 = vmatprep.subr.bf16.mxu0 0
    %1035 = vmatpush1.bf16.msra.mxu0 0
    %1036 = vmatprep.subr.bf16.mxu0 0
    %1037 = vmatpush1.bf16.msra.mxu0 0
    %1038 = vmatprep.subr.bf16.mxu0 0
    %1039 = vmatpush1.bf16.msra.mxu0 0
    %1040 = vmatprep.subr.bf16.mxu0 0
    %1041 = vmatpush1.bf16.msra.mxu0 0
    %1042 = vmatprep.subr.bf16.mxu0 0
    %1043 = vmatpush1.bf16.msra.mxu0 0
    %1044 = vmatprep.subr.bf16.mxu0 0
    %1045 = vmatpush1.bf16.msra.mxu0 0
    %1046 = vmatprep.subr.bf16.mxu0 0
    %1047 = vmatpush1.bf16.msra.mxu0 %v1028
    %1048 = vmatprep.subr.bf16.mxu0 0
    %1049 = vmatpush1.bf16.msra.mxu0 %v1027
    %1050 = vmatprep.subr.bf16.mxu0 0
    %1051 = vmatpush2.bf16.msra.mxu0 0
    %1052 = vmatprep.subr.bf16.mxu0 0
    %1053 = vmatpush2.bf16.msra.mxu0 0
    %1054 = vmatprep.subr.bf16.mxu0 0
    %1055 = vmatpush2.bf16.msra.mxu0 0
    %1056 = vmatprep.subr.bf16.mxu0 0
    %1057 = vmatpush2.bf16.msra.mxu0 0
    %1058 = vmatprep.subr.bf16.mxu0 0
    %1059 = vmatpush2.bf16.msra.mxu0 0
    %1060 = vmatprep.subr.bf16.mxu0 0
    %1061 = vmatpush2.bf16.msra.mxu0 0
    %1062 = vmatprep.subr.bf16.mxu0 0
    %1063 = vmatpush2.bf16.msra.mxu0 0
    %1064 = vmatprep.subr.bf16.mxu0 0
    %1065 = vmatpush2.bf16.msra.mxu0 0
    %1066 = vmatprep.mubr.bf16.mxu0 0
    %1067 = vmatmul.mubr.bf16.gmra.mxu0 %v1032
    %v1068 = vpop.f32.mrf.mxu0
    %v1069 = vadd.f32 %v1014, %v1068
    %v1070 = vpop.f32.mrf.mxu0
    %v1071 = vpop.f32.mrf.mxu0
    %v1072 = vadd.f32 %v1014, %v1071
    %v1073 = vpop.f32.mrf.mxu0
    %1074 = vdwg.mxu0
    %v1077 = vcombine.high %v1069, %v1069
    %v1079 = vunpack.c.l.s4 1983009808
    %v1080 = vunpack.c.0.s8 %v1079
    %v1081 = vlaneseq
    %v1082 = vshrl.u32 %v1081, 7
    %v1083 = vsub.s32 %v1080, %v1082
    %v1084 = vrot.slane %v1069, %v1083
    %v1086 = vunpack.c.l.s4 1983009808
    %v1087 = vunpack.c.0.s8 %v1086
    %v1088 = vlaneseq
    %v1089 = vshrl.u32 %v1088, 7
    %v1090 = vsub.s32 %v1087, %v1089
    %v1091 = vrot.slane %v1077, %v1090
    %v1092 = vcombine.high %v1084, %v1084
    %v1093 = vcombine.high %v1091, %v1091
    %v1094 = vcombine.high %v1072, %v1072
    %v1096 = vunpack.c.l.s4 1983009808
    %v1097 = vunpack.c.0.s8 %v1096
    %v1098 = vlaneseq
    %v1099 = vshrl.u32 %v1098, 7
    %v1100 = vsub.s32 %v1097, %v1099
    %v1101 = vrot.slane %v1072, %v1100
    %v1103 = vunpack.c.l.s4 1983009808
    %v1104 = vunpack.c.0.s8 %v1103
    %v1105 = vlaneseq
    %v1106 = vshrl.u32 %v1105, 7
    %v1107 = vsub.s32 %v1104, %v1106
    %v1108 = vrot.slane %v1094, %v1107
    %v1109 = vcombine.high %v1101, %v1101
    %v1110 = vcombine.high %v1108, %v1108
    %v1123 = vunpack.c.l.b16 %v47
    %v1124 = vunpack.c.l.b16 %v48
    %v1125 = vunpack.c.l.b16 %v49
    %v1126 = vunpack.c.l.b16 %v50
    %v1127 = vpack.c.b16 %v1124, %v1123
    %v1128 = vpack.c.b16 %v1126, %v1125
    %1131 = vmatprep.subr.bf16.mxu0 0
    %1132 = vmatpush1.bf16.msra.mxu0 0
    %1133 = vmatprep.subr.bf16.mxu0 0
    %1134 = vmatpush1.bf16.msra.mxu0 0
    %1135 = vmatprep.subr.bf16.mxu0 0
    %1136 = vmatpush1.bf16.msra.mxu0 0
    %1137 = vmatprep.subr.bf16.mxu0 0
    %1138 = vmatpush1.bf16.msra.mxu0 0
    %1139 = vmatprep.subr.bf16.mxu0 0
    %1140 = vmatpush1.bf16.msra.mxu0 0
    %1141 = vmatprep.subr.bf16.mxu0 0
    %1142 = vmatpush1.bf16.msra.mxu0 0
    %1143 = vmatprep.subr.bf16.mxu0 0
    %1144 = vmatpush1.bf16.msra.mxu0 %v1128
    %1145 = vmatprep.subr.bf16.mxu0 0
    %1146 = vmatpush1.bf16.msra.mxu0 %v1127
    %1147 = vmatprep.subr.bf16.mxu0 0
    %1148 = vmatpush2.bf16.msra.mxu0 0
    %1149 = vmatprep.subr.bf16.mxu0 0
    %1150 = vmatpush2.bf16.msra.mxu0 0
    %1151 = vmatprep.subr.bf16.mxu0 0
    %1152 = vmatpush2.bf16.msra.mxu0 0
    %1153 = vmatprep.subr.bf16.mxu0 0
    %1154 = vmatpush2.bf16.msra.mxu0 0
    %1155 = vmatprep.subr.bf16.mxu0 0
    %1156 = vmatpush2.bf16.msra.mxu0 0
    %1157 = vmatprep.subr.bf16.mxu0 0
    %1158 = vmatpush2.bf16.msra.mxu0 0
    %1159 = vmatprep.subr.bf16.mxu0 0
    %1160 = vmatpush2.bf16.msra.mxu0 0
    %1161 = vmatprep.subr.bf16.mxu0 0
    %1162 = vmatpush2.bf16.msra.mxu0 0
    %1163 = vmatprep.mubr.bf16.mxu0 0
    %1164 = vmatmul.mubr.bf16.gmra.mxu0 %v229
    %v1165 = vpop.f32.mrf.mxu0
    %v1166 = vadd.f32 0.0, %v1165
    %v1167 = vpop.f32.mrf.mxu0
    %v1168 = vpop.f32.mrf.mxu0
    %v1169 = vpop.f32.mrf.mxu0
    %1170 = vdwg.mxu0
    %v1171 = vadd.f32 %v1084, %v1166
    %v1172 = vxor.u32 %v1171, 2147483648
    %v1173 = vmul.f32 %v1172, 1.442695
    %v1174 = vpow.pop %v1173
    %v1175 = vadd.f32 %v1174, 1.0
    %v1176 = vrcp.pop %v1175
    %v1177 = vmul.f32 1.0, %v1176
    %v1178 = vtanh.pop %v1171
    %v1179 = vmul.f32 %v1177, 0.0
    %1181 = vrot.lane.b32.xlu0 %v1178, 64
    %v1182 = vpop.permute.xlu0 %1181
    %v1184 = vmul.f32 %v1177, %v1182
    %1186 = vrot.lane.b32.xlu0 %v1184, 32
    %v1187 = vpop.permute.xlu0 %1186
    %v1189 = vadd.f32 %v1179, %v1187
    %v1190 = vtanh.pop %v1189
    %1192 = vrot.lane.b32.xlu0 %v1190, 64
    %v1193 = vpop.permute.xlu0 %1192
    %v1195 = vmul.f32 %v1177, %v1193
    %v1196 = vpack.c.bf16 %v1195, %v1195
    %1198 = vrot.lane.b32.xlu0 %v1196, 32
    %v1199 = vpop.permute.xlu0 %1198
    %v1201 = vsel %vm94, %v1199, 0
    %1203 = vmatprep.subr.bf16.mxu0 0
    %1204 = vmatpush1.bf16.msra.mxu0 0
    %1205 = vmatprep.subr.bf16.mxu0 0
    %1206 = vmatpush1.bf16.msra.mxu0 0
    %1207 = vmatprep.subr.bf16.mxu0 0
    %1208 = vmatpush1.bf16.msra.mxu0 0
    %1209 = vmatprep.subr.bf16.mxu0 0
    %1210 = vmatpush1.bf16.msra.mxu0 0
    %1211 = vmatprep.subr.bf16.mxu0 0
    %1212 = vmatpush1.bf16.msra.mxu0 0
    %1213 = vmatprep.subr.bf16.mxu0 0
    %1214 = vmatpush1.bf16.msra.mxu0 0
    %1215 = vmatprep.subr.bf16.mxu0 0
    %1216 = vmatpush1.bf16.msra.mxu0 %v1128
    %1217 = vmatprep.subr.bf16.mxu0 0
    %1218 = vmatpush1.bf16.msra.mxu0 %v1127
    %1219 = vmatprep.subr.bf16.mxu0 0
    %1220 = vmatpush2.bf16.msra.mxu0 0
    %1221 = vmatprep.subr.bf16.mxu0 0
    %1222 = vmatpush2.bf16.msra.mxu0 0
    %1223 = vmatprep.subr.bf16.mxu0 0
    %1224 = vmatpush2.bf16.msra.mxu0 0
    %1225 = vmatprep.subr.bf16.mxu0 0
    %1226 = vmatpush2.bf16.msra.mxu0 0
    %1227 = vmatprep.subr.bf16.mxu0 0
    %1228 = vmatpush2.bf16.msra.mxu0 0
    %1229 = vmatprep.subr.bf16.mxu0 0
    %1230 = vmatpush2.bf16.msra.mxu0 0
    %1231 = vmatprep.subr.bf16.mxu0 0
    %1232 = vmatpush2.bf16.msra.mxu0 0
    %1233 = vmatprep.subr.bf16.mxu0 0
    %1234 = vmatpush2.bf16.msra.mxu0 0
    %1235 = vmatprep.mubr.bf16.mxu0 0
    %1236 = vmatmul.mubr.bf16.gmra.mxu0 %v1201
    %v1237 = vpop.f32.mrf.mxu0
    %v1238 = vadd.f32 0.0, %v1237
    %v1239 = vpop.f32.mrf.mxu0
    %v1240 = vpop.f32.mrf.mxu0
    %v1241 = vpop.f32.mrf.mxu0
    %1242 = vdwg.mxu0
    %v1243 = vadd.f32 %v1092, %v1238
    %v1244 = vxor.u32 %v1243, 2147483648
    %v1245 = vmul.f32 %v1244, 1.442695
    %v1246 = vpow.pop %v1245
    %v1247 = vadd.f32 %v1246, 1.0
    %v1248 = vrcp.pop %v1247
    %v1249 = vmul.f32 1.0, %v1248
    %v1250 = vtanh.pop %v1243
    %v1251 = vmul.f32 %v1249, %v1189
    %1253 = vrot.lane.b32.xlu0 %v1250, 64
    %v1254 = vpop.permute.xlu0 %1253
    %v1256 = vmul.f32 %v1249, %v1254
    %1258 = vrot.lane.b32.xlu0 %v1256, 32
    %v1259 = vpop.permute.xlu0 %1258
    %v1261 = vadd.f32 %v1251, %v1259
    %v1262 = vtanh.pop %v1261
    %1264 = vrot.lane.b32.xlu0 %v1262, 64
    %v1265 = vpop.permute.xlu0 %1264
    %v1267 = vmul.f32 %v1249, %v1265
    %v1268 = vpack.c.bf16 %v1267, %v1267
    %1270 = vrot.lane.b32.xlu0 %v1268, 32
    %v1271 = vpop.permute.xlu0 %1270
    %v1273 = vsel %vm94, %v1271, 0
    %1275 = vmatprep.subr.bf16.mxu0 0
    %1276 = vmatpush1.bf16.msra.mxu0 0
    %1277 = vmatprep.subr.bf16.mxu0 0
    %1278 = vmatpush1.bf16.msra.mxu0 0
    %1279 = vmatprep.subr.bf16.mxu0 0
    %1280 = vmatpush1.bf16.msra.mxu0 0
    %1281 = vmatprep.subr.bf16.mxu0 0
    %1282 = vmatpush1.bf16.msra.mxu0 0
    %1283 = vmatprep.subr.bf16.mxu0 0
    %1284 = vmatpush1.bf16.msra.mxu0 0
    %1285 = vmatprep.subr.bf16.mxu0 0
    %1286 = vmatpush1.bf16.msra.mxu0 0
    %1287 = vmatprep.subr.bf16.mxu0 0
    %1288 = vmatpush1.bf16.msra.mxu0 %v1128
    %1289 = vmatprep.subr.bf16.mxu0 0
    %1290 = vmatpush1.bf16.msra.mxu0 %v1127
    %1291 = vmatprep.subr.bf16.mxu0 0
    %1292 = vmatpush2.bf16.msra.mxu0 0
    %1293 = vmatprep.subr.bf16.mxu0 0
    %1294 = vmatpush2.bf16.msra.mxu0 0
    %1295 = vmatprep.subr.bf16.mxu0 0
    %1296 = vmatpush2.bf16.msra.mxu0 0
    %1297 = vmatprep.subr.bf16.mxu0 0
    %1298 = vmatpush2.bf16.msra.mxu0 0
    %1299 = vmatprep.subr.bf16.mxu0 0
    %1300 = vmatpush2.bf16.msra.mxu0 0
    %1301 = vmatprep.subr.bf16.mxu0 0
    %1302 = vmatpush2.bf16.msra.mxu0 0
    %1303 = vmatprep.subr.bf16.mxu0 0
    %1304 = vmatpush2.bf16.msra.mxu0 0
    %1305 = vmatprep.subr.bf16.mxu0 0
    %1306 = vmatpush2.bf16.msra.mxu0 0
    %1307 = vmatprep.mubr.bf16.mxu0 0
    %1308 = vmatmul.mubr.bf16.gmra.mxu0 %v1273
    %v1309 = vpop.f32.mrf.mxu0
    %v1310 = vadd.f32 0.0, %v1309
    %v1311 = vpop.f32.mrf.mxu0
    %v1312 = vpop.f32.mrf.mxu0
    %v1313 = vpop.f32.mrf.mxu0
    %1314 = vdwg.mxu0
    %v1315 = vadd.f32 %v1091, %v1310
    %v1316 = vxor.u32 %v1315, 2147483648
    %v1317 = vmul.f32 %v1316, 1.442695
    %v1318 = vpow.pop %v1317
    %v1319 = vadd.f32 %v1318, 1.0
    %v1320 = vrcp.pop %v1319
    %v1321 = vmul.f32 1.0, %v1320
    %v1322 = vtanh.pop %v1315
    %v1323 = vmul.f32 %v1321, %v1261
    %1325 = vrot.lane.b32.xlu0 %v1322, 64
    %v1326 = vpop.permute.xlu0 %1325
    %v1328 = vmul.f32 %v1321, %v1326
    %1330 = vrot.lane.b32.xlu0 %v1328, 32
    %v1331 = vpop.permute.xlu0 %1330
    %v1333 = vadd.f32 %v1323, %v1331
    %v1334 = vtanh.pop %v1333
    %1336 = vrot.lane.b32.xlu0 %v1334, 64
    %v1337 = vpop.permute.xlu0 %1336
    %v1339 = vmul.f32 %v1321, %v1337
    %v1340 = vpack.c.bf16 %v1339, %v1339
    %1342 = vrot.lane.b32.xlu0 %v1340, 32
    %v1343 = vpop.permute.xlu0 %1342
    %v1345 = vsel %vm94, %v1343, 0
    %1347 = vmatprep.subr.bf16.mxu0 0
    %1348 = vmatpush1.bf16.msra.mxu0 0
    %1349 = vmatprep.subr.bf16.mxu0 0
    %1350 = vmatpush1.bf16.msra.mxu0 0
    %1351 = vmatprep.subr.bf16.mxu0 0
    %1352 = vmatpush1.bf16.msra.mxu0 0
    %1353 = vmatprep.subr.bf16.mxu0 0
    %1354 = vmatpush1.bf16.msra.mxu0 0
    %1355 = vmatprep.subr.bf16.mxu0 0
    %1356 = vmatpush1.bf16.msra.mxu0 0
    %1357 = vmatprep.subr.bf16.mxu0 0
    %1358 = vmatpush1.bf16.msra.mxu0 0
    %1359 = vmatprep.subr.bf16.mxu0 0
    %1360 = vmatpush1.bf16.msra.mxu0 %v1128
    %1361 = vmatprep.subr.bf16.mxu0 0
    %1362 = vmatpush1.bf16.msra.mxu0 %v1127
    %1363 = vmatprep.subr.bf16.mxu0 0
    %1364 = vmatpush2.bf16.msra.mxu0 0
    %1365 = vmatprep.subr.bf16.mxu0 0
    %1366 = vmatpush2.bf16.msra.mxu0 0
    %1367 = vmatprep.subr.bf16.mxu0 0
    %1368 = vmatpush2.bf16.msra.mxu0 0
    %1369 = vmatprep.subr.bf16.mxu0 0
    %1370 = vmatpush2.bf16.msra.mxu0 0
    %1371 = vmatprep.subr.bf16.mxu0 0
    %1372 = vmatpush2.bf16.msra.mxu0 0
    %1373 = vmatprep.subr.bf16.mxu0 0
    %1374 = vmatpush2.bf16.msra.mxu0 0
    %1375 = vmatprep.subr.bf16.mxu0 0
    %1376 = vmatpush2.bf16.msra.mxu0 0
    %1377 = vmatprep.subr.bf16.mxu0 0
    %1378 = vmatpush2.bf16.msra.mxu0 0
    %1379 = vmatprep.mubr.bf16.mxu0 0
    %1380 = vmatmul.mubr.bf16.gmra.mxu0 %v1345
    %v1381 = vpop.f32.mrf.mxu0
    %v1382 = vadd.f32 0.0, %v1381
    %v1383 = vpop.f32.mrf.mxu0
    %v1384 = vpop.f32.mrf.mxu0
    %v1385 = vpop.f32.mrf.mxu0
    %1386 = vdwg.mxu0
    %v1387 = vadd.f32 %v1093, %v1382
    %v1388 = vxor.u32 %v1387, 2147483648
    %v1389 = vmul.f32 %v1388, 1.442695
    %v1390 = vpow.pop %v1389
    %v1391 = vadd.f32 %v1390, 1.0
    %v1392 = vrcp.pop %v1391
    %v1393 = vmul.f32 1.0, %v1392
    %v1394 = vtanh.pop %v1387
    %v1395 = vmul.f32 %v1393, %v1333
    %1397 = vrot.lane.b32.xlu0 %v1394, 64
    %v1398 = vpop.permute.xlu0 %1397
    %v1400 = vmul.f32 %v1393, %v1398
    %1402 = vrot.lane.b32.xlu0 %v1400, 32
    %v1403 = vpop.permute.xlu0 %1402
    %v1405 = vadd.f32 %v1395, %v1403
    %v1406 = vtanh.pop %v1405
    %1408 = vrot.lane.b32.xlu0 %v1406, 64
    %v1409 = vpop.permute.xlu0 %1408
    %v1411 = vmul.f32 %v1393, %v1409
    %v1412 = vpack.c.bf16 %v1411, %v1411
    %1414 = vrot.lane.b32.xlu0 %v1412, 32
    %v1415 = vpop.permute.xlu0 %1414
    %v1417 = vsel %vm94, %v1415, 0
    %1419 = vmatprep.subr.bf16.mxu0 0
    %1420 = vmatpush1.bf16.msra.mxu0 0
    %1421 = vmatprep.subr.bf16.mxu0 0
    %1422 = vmatpush1.bf16.msra.mxu0 0
    %1423 = vmatprep.subr.bf16.mxu0 0
    %1424 = vmatpush1.bf16.msra.mxu0 0
    %1425 = vmatprep.subr.bf16.mxu0 0
    %1426 = vmatpush1.bf16.msra.mxu0 0
    %1427 = vmatprep.subr.bf16.mxu0 0
    %1428 = vmatpush1.bf16.msra.mxu0 0
    %1429 = vmatprep.subr.bf16.mxu0 0
    %1430 = vmatpush1.bf16.msra.mxu0 0
    %1431 = vmatprep.subr.bf16.mxu0 0
    %1432 = vmatpush1.bf16.msra.mxu0 %v1128
    %1433 = vmatprep.subr.bf16.mxu0 0
    %1434 = vmatpush1.bf16.msra.mxu0 %v1127
    %1435 = vmatprep.subr.bf16.mxu0 0
    %1436 = vmatpush2.bf16.msra.mxu0 0
    %1437 = vmatprep.subr.bf16.mxu0 0
    %1438 = vmatpush2.bf16.msra.mxu0 0
    %1439 = vmatprep.subr.bf16.mxu0 0
    %1440 = vmatpush2.bf16.msra.mxu0 0
    %1441 = vmatprep.subr.bf16.mxu0 0
    %1442 = vmatpush2.bf16.msra.mxu0 0
    %1443 = vmatprep.subr.bf16.mxu0 0
    %1444 = vmatpush2.bf16.msra.mxu0 0
    %1445 = vmatprep.subr.bf16.mxu0 0
    %1446 = vmatpush2.bf16.msra.mxu0 0
    %1447 = vmatprep.subr.bf16.mxu0 0
    %1448 = vmatpush2.bf16.msra.mxu0 0
    %1449 = vmatprep.subr.bf16.mxu0 0
    %1450 = vmatpush2.bf16.msra.mxu0 0
    %1451 = vmatprep.mubr.bf16.mxu0 0
    %1452 = vmatmul.mubr.bf16.gmra.mxu0 %v1417
    %v1453 = vpop.f32.mrf.mxu0
    %v1454 = vadd.f32 0.0, %v1453
    %v1455 = vpop.f32.mrf.mxu0
    %v1456 = vpop.f32.mrf.mxu0
    %v1457 = vpop.f32.mrf.mxu0
    %1458 = vdwg.mxu0
    %v1459 = vadd.f32 %v1101, %v1454
    %v1460 = vxor.u32 %v1459, 2147483648
    %v1461 = vmul.f32 %v1460, 1.442695
    %v1462 = vpow.pop %v1461
    %v1463 = vadd.f32 %v1462, 1.0
    %v1464 = vrcp.pop %v1463
    %v1465 = vmul.f32 1.0, %v1464
    %v1466 = vtanh.pop %v1459
    %v1467 = vmul.f32 %v1465, %v1405
    %1469 = vrot.lane.b32.xlu0 %v1466, 64
    %v1470 = vpop.permute.xlu0 %1469
    %v1472 = vmul.f32 %v1465, %v1470
    %1474 = vrot.lane.b32.xlu0 %v1472, 32
    %v1475 = vpop.permute.xlu0 %1474
    %v1477 = vadd.f32 %v1467, %v1475
    %v1478 = vtanh.pop %v1477
    %1480 = vrot.lane.b32.xlu0 %v1478, 64
    %v1481 = vpop.permute.xlu0 %1480
    %v1483 = vmul.f32 %v1465, %v1481
    %v1484 = vpack.c.bf16 %v1483, %v1483
    %1486 = vrot.lane.b32.xlu0 %v1484, 32
    %v1487 = vpop.permute.xlu0 %1486
    %v1489 = vsel %vm94, %v1487, 0
    %1491 = vmatprep.subr.bf16.mxu0 0
    %1492 = vmatpush1.bf16.msra.mxu0 0
    %1493 = vmatprep.subr.bf16.mxu0 0
    %1494 = vmatpush1.bf16.msra.mxu0 0
    %1495 = vmatprep.subr.bf16.mxu0 0
    %1496 = vmatpush1.bf16.msra.mxu0 0
    %1497 = vmatprep.subr.bf16.mxu0 0
    %1498 = vmatpush1.bf16.msra.mxu0 0
    %1499 = vmatprep.subr.bf16.mxu0 0
    %1500 = vmatpush1.bf16.msra.mxu0 0
    %1501 = vmatprep.subr.bf16.mxu0 0
    %1502 = vmatpush1.bf16.msra.mxu0 0
    %1503 = vmatprep.subr.bf16.mxu0 0
    %1504 = vmatpush1.bf16.msra.mxu0 %v1128
    %1505 = vmatprep.subr.bf16.mxu0 0
    %1506 = vmatpush1.bf16.msra.mxu0 %v1127
    %1507 = vmatprep.subr.bf16.mxu0 0
    %1508 = vmatpush2.bf16.msra.mxu0 0
    %1509 = vmatprep.subr.bf16.mxu0 0
    %1510 = vmatpush2.bf16.msra.mxu0 0
    %1511 = vmatprep.subr.bf16.mxu0 0
    %1512 = vmatpush2.bf16.msra.mxu0 0
    %1513 = vmatprep.subr.bf16.mxu0 0
    %1514 = vmatpush2.bf16.msra.mxu0 0
    %1515 = vmatprep.subr.bf16.mxu0 0
    %1516 = vmatpush2.bf16.msra.mxu0 0
    %1517 = vmatprep.subr.bf16.mxu0 0
    %1518 = vmatpush2.bf16.msra.mxu0 0
    %1519 = vmatprep.subr.bf16.mxu0 0
    %1520 = vmatpush2.bf16.msra.mxu0 0
    %1521 = vmatprep.subr.bf16.mxu0 0
    %1522 = vmatpush2.bf16.msra.mxu0 0
    %1523 = vmatprep.mubr.bf16.mxu0 0
    %1524 = vmatmul.mubr.bf16.gmra.mxu0 %v1489
    %v1525 = vpop.f32.mrf.mxu0
    %v1526 = vadd.f32 0.0, %v1525
    %v1527 = vpop.f32.mrf.mxu0
    %v1528 = vpop.f32.mrf.mxu0
    %v1529 = vpop.f32.mrf.mxu0
    %1530 = vdwg.mxu0
    %v1531 = vadd.f32 %v1109, %v1526
    %v1532 = vxor.u32 %v1531, 2147483648
    %v1533 = vmul.f32 %v1532, 1.442695
    %v1534 = vpow.pop %v1533
    %v1535 = vadd.f32 %v1534, 1.0
    %v1536 = vrcp.pop %v1535
    %v1537 = vmul.f32 1.0, %v1536
    %v1538 = vtanh.pop %v1531
    %v1539 = vmul.f32 %v1537, %v1477
    %1541 = vrot.lane.b32.xlu0 %v1538, 64
    %v1542 = vpop.permute.xlu0 %1541
    %v1544 = vmul.f32 %v1537, %v1542
    %1546 = vrot.lane.b32.xlu0 %v1544, 32
    %v1547 = vpop.permute.xlu0 %1546
    %v1549 = vadd.f32 %v1539, %v1547
    %v1550 = vtanh.pop %v1549
    %1552 = vrot.lane.b32.xlu0 %v1550, 64
    %v1553 = vpop.permute.xlu0 %1552
    %v1555 = vmul.f32 %v1537, %v1553
    %v1556 = vpack.c.bf16 %v1555, %v1555
    %1558 = vrot.lane.b32.xlu0 %v1556, 32
    %v1559 = vpop.permute.xlu0 %1558
    %v1561 = vsel %vm94, %v1559, 0
    %1563 = vmatprep.subr.bf16.mxu0 0
    %1564 = vmatpush1.bf16.msra.mxu0 0
    %1565 = vmatprep.subr.bf16.mxu0 0
    %1566 = vmatpush1.bf16.msra.mxu0 0
    %1567 = vmatprep.subr.bf16.mxu0 0
    %1568 = vmatpush1.bf16.msra.mxu0 0
    %1569 = vmatprep.subr.bf16.mxu0 0
    %1570 = vmatpush1.bf16.msra.mxu0 0
    %1571 = vmatprep.subr.bf16.mxu0 0
    %1572 = vmatpush1.bf16.msra.mxu0 0
    %1573 = vmatprep.subr.bf16.mxu0 0
    %1574 = vmatpush1.bf16.msra.mxu0 0
    %1575 = vmatprep.subr.bf16.mxu0 0
    %1576 = vmatpush1.bf16.msra.mxu0 %v1128
    %1577 = vmatprep.subr.bf16.mxu0 0
    %1578 = vmatpush1.bf16.msra.mxu0 %v1127
    %1579 = vmatprep.subr.bf16.mxu0 0
    %1580 = vmatpush2.bf16.msra.mxu0 0
    %1581 = vmatprep.subr.bf16.mxu0 0
    %1582 = vmatpush2.bf16.msra.mxu0 0
    %1583 = vmatprep.subr.bf16.mxu0 0
    %1584 = vmatpush2.bf16.msra.mxu0 0
    %1585 = vmatprep.subr.bf16.mxu0 0
    %1586 = vmatpush2.bf16.msra.mxu0 0
    %1587 = vmatprep.subr.bf16.mxu0 0
    %1588 = vmatpush2.bf16.msra.mxu0 0
    %1589 = vmatprep.subr.bf16.mxu0 0
    %1590 = vmatpush2.bf16.msra.mxu0 0
    %1591 = vmatprep.subr.bf16.mxu0 0
    %1592 = vmatpush2.bf16.msra.mxu0 0
    %1593 = vmatprep.subr.bf16.mxu0 0
    %1594 = vmatpush2.bf16.msra.mxu0 0
    %1595 = vmatprep.mubr.bf16.mxu0 0
    %1596 = vmatmul.mubr.bf16.gmra.mxu0 %v1561
    %v1597 = vpop.f32.mrf.mxu0
    %v1598 = vadd.f32 0.0, %v1597
    %v1599 = vpop.f32.mrf.mxu0
    %v1600 = vpop.f32.mrf.mxu0
    %v1601 = vpop.f32.mrf.mxu0
    %1602 = vdwg.mxu0
    %v1603 = vadd.f32 %v1108, %v1598
    %v1604 = vxor.u32 %v1603, 2147483648
    %v1605 = vmul.f32 %v1604, 1.442695
    %v1606 = vpow.pop %v1605
    %v1607 = vadd.f32 %v1606, 1.0
    %v1608 = vrcp.pop %v1607
    %v1609 = vmul.f32 1.0, %v1608
    %v1610 = vtanh.pop %v1603
    %v1611 = vmul.f32 %v1609, %v1549
    %1613 = vrot.lane.b32.xlu0 %v1610, 64
    %v1614 = vpop.permute.xlu0 %1613
    %v1616 = vmul.f32 %v1609, %v1614
    %1618 = vrot.lane.b32.xlu0 %v1616, 32
    %v1619 = vpop.permute.xlu0 %1618
    %v1621 = vadd.f32 %v1611, %v1619
    %v1622 = vtanh.pop %v1621
    %1624 = vrot.lane.b32.xlu0 %v1622, 64
    %v1625 = vpop.permute.xlu0 %1624
    %v1627 = vmul.f32 %v1609, %v1625
    %v1628 = vpack.c.bf16 %v1627, %v1627
    %1630 = vrot.lane.b32.xlu0 %v1628, 32
    %v1631 = vpop.permute.xlu0 %1630
    %v1633 = vsel %vm94, %v1631, 0
    %1635 = vmatprep.subr.bf16.mxu0 0
    %1636 = vmatpush1.bf16.msra.mxu0 0
    %1637 = vmatprep.subr.bf16.mxu0 0
    %1638 = vmatpush1.bf16.msra.mxu0 0
    %1639 = vmatprep.subr.bf16.mxu0 0
    %1640 = vmatpush1.bf16.msra.mxu0 0
    %1641 = vmatprep.subr.bf16.mxu0 0
    %1642 = vmatpush1.bf16.msra.mxu0 0
    %1643 = vmatprep.subr.bf16.mxu0 0
    %1644 = vmatpush1.bf16.msra.mxu0 0
    %1645 = vmatprep.subr.bf16.mxu0 0
    %1646 = vmatpush1.bf16.msra.mxu0 0
    %1647 = vmatprep.subr.bf16.mxu0 0
    %1648 = vmatpush1.bf16.msra.mxu0 %v1128
    %1649 = vmatprep.subr.bf16.mxu0 0
    %1650 = vmatpush1.bf16.msra.mxu0 %v1127
    %1651 = vmatprep.subr.bf16.mxu0 0
    %1652 = vmatpush2.bf16.msra.mxu0 0
    %1653 = vmatprep.subr.bf16.mxu0 0
    %1654 = vmatpush2.bf16.msra.mxu0 0
    %1655 = vmatprep.subr.bf16.mxu0 0
    %1656 = vmatpush2.bf16.msra.mxu0 0
    %1657 = vmatprep.subr.bf16.mxu0 0
    %1658 = vmatpush2.bf16.msra.mxu0 0
    %1659 = vmatprep.subr.bf16.mxu0 0
    %1660 = vmatpush2.bf16.msra.mxu0 0
    %1661 = vmatprep.subr.bf16.mxu0 0
    %1662 = vmatpush2.bf16.msra.mxu0 0
    %1663 = vmatprep.subr.bf16.mxu0 0
    %1664 = vmatpush2.bf16.msra.mxu0 0
    %1665 = vmatprep.subr.bf16.mxu0 0
    %1666 = vmatpush2.bf16.msra.mxu0 0
    %1667 = vmatprep.mubr.bf16.mxu0 0
    %1668 = vmatmul.mubr.bf16.gmra.mxu0 %v1633
    %v1669 = vpop.f32.mrf.mxu0
    %v1670 = vadd.f32 0.0, %v1669
    %v1671 = vpop.f32.mrf.mxu0
    %v1672 = vpop.f32.mrf.mxu0
    %v1673 = vpop.f32.mrf.mxu0
    %1674 = vdwg.mxu0
    %v1675 = vadd.f32 %v1110, %v1670
    %v1676 = vxor.u32 %v1675, 2147483648
    %v1677 = vmul.f32 %v1676, 1.442695
    %v1678 = vpow.pop %v1677
    %v1679 = vadd.f32 %v1678, 1.0
    %v1680 = vrcp.pop %v1679
    %v1681 = vmul.f32 1.0, %v1680
    %v1682 = vtanh.pop %v1675
    %v1683 = vmul.f32 %v1681, %v1621
    %1685 = vrot.lane.b32.xlu0 %v1682, 64
    %v1686 = vpop.permute.xlu0 %1685
    %v1688 = vmul.f32 %v1681, %v1686
    %1690 = vrot.lane.b32.xlu0 %v1688, 32
    %v1691 = vpop.permute.xlu0 %1690
    %v1693 = vadd.f32 %v1683, %v1691
    %v1694 = vtanh.pop %v1693
    %1696 = vrot.lane.b32.xlu0 %v1694, 64
    %v1697 = vpop.permute.xlu0 %1696
    %v1699 = vmul.f32 %v1681, %v1697
    %v1700 = vld [vmem:[%s7] sm:$0x1]
    %s1701 = sld [smem:[#allocation2]]
    %v1702 = vstv %s1701
    %v1705 = vunpack.c.l.s4 1983009808
    %v1706 = vunpack.c.0.s8 %v1705
    %v1707 = vlaneseq
    %v1708 = vshrl.u32 %v1707, 7
    %v1709 = vsub.s32 %v1706, %v1708
    %v1710 = vrot.slane %v1699, %v1709
    %1711 = vrot.lane.b32.xlu0 %v1710, 32
    %v1712 = vpop.permute.xlu0 %1711
    %v1714 = vsel %vm94, %v1700, 0
    %v1716 = vsel %vm94, %v1712, 0
    %1718 = vmatprep.subr.mxu0 0.0
    %1719 = vmatpush1.xpose.msra.mxu0 0.0
    %1720 = vmatprep.subr.mxu0 0.0
    %1721 = vmatpush1.xpose.msra.mxu0 0.0
    %1722 = vmatprep.subr.mxu0 0.0
    %1723 = vmatpush1.xpose.msra.mxu0 0.0
    %1724 = vmatprep.subr.mxu0 0.0
    %1725 = vmatpush1.xpose.msra.mxu0 0.0
    %1726 = vmatprep.subr.mxu0 0.0
    %1727 = vmatpush1.xpose.msra.mxu0 0.0
    %1728 = vmatprep.subr.mxu0 0.0
    %1729 = vmatpush1.xpose.msra.mxu0 0.0
    %1730 = vmatprep.subr.mxu0 0.0
    %1731 = vmatpush1.xpose.msra.mxu0 0.0
    %1732 = vmatprep.subr.mxu0 0.0
    %1733 = vmatpush1.xpose.msra.mxu0 0.0
    %1734 = vmatprep.subr.mxu0 0.0
    %1735 = vmatpush1.xpose.msra.mxu0 0.0
    %1736 = vmatprep.subr.mxu0 0.0
    %1737 = vmatpush1.xpose.msra.mxu0 0.0
    %1738 = vmatprep.subr.mxu0 0.0
    %1739 = vmatpush1.xpose.msra.mxu0 0.0
    %1740 = vmatprep.subr.mxu0 0.0
    %1741 = vmatpush1.xpose.msra.mxu0 0.0
    %1742 = vmatprep.subr.mxu0 0.0
    %1743 = vmatpush1.xpose.msra.mxu0 0.0
    %1744 = vmatprep.subr.mxu0 0.0
    %1745 = vmatpush1.xpose.msra.mxu0 0.0
    %1746 = vmatprep.subr.mxu0 0.0
    %1747 = vmatpush1.xpose.msra.mxu0 0.0
    %1748 = vmatprep.subr.mxu0 0.0
    %1749 = vmatpush1.xpose.msra.mxu0 %v1716
    %1750 = vmatprep.subr.mxu0 0.0
    %1751 = vmatpush2.xpose.msra.mxu0 0.0
    %1752 = vmatprep.subr.mxu0 0.0
    %1753 = vmatpush2.xpose.msra.mxu0 0.0
    %1754 = vmatprep.subr.mxu0 0.0
    %1755 = vmatpush2.xpose.msra.mxu0 0.0
    %1756 = vmatprep.subr.mxu0 0.0
    %1757 = vmatpush2.xpose.msra.mxu0 0.0
    %1758 = vmatprep.subr.mxu0 0.0
    %1759 = vmatpush2.xpose.msra.mxu0 0.0
    %1760 = vmatprep.subr.mxu0 0.0
    %1761 = vmatpush2.xpose.msra.mxu0 0.0
    %1762 = vmatprep.subr.mxu0 0.0
    %1763 = vmatpush2.xpose.msra.mxu0 0.0
    %1764 = vmatprep.subr.mxu0 0.0
    %1765 = vmatpush2.xpose.msra.mxu0 0.0
    %1766 = vmatprep.subr.mxu0 0.0
    %1767 = vmatpush2.xpose.msra.mxu0 0.0
    %1768 = vmatprep.subr.mxu0 0.0
    %1769 = vmatpush2.xpose.msra.mxu0 0.0
    %1770 = vmatprep.subr.mxu0 0.0
    %1771 = vmatpush2.xpose.msra.mxu0 0.0
    %1772 = vmatprep.subr.mxu0 0.0
    %1773 = vmatpush2.xpose.msra.mxu0 0.0
    %1774 = vmatprep.subr.mxu0 0.0
    %1775 = vmatpush2.xpose.msra.mxu0 0.0
    %1776 = vmatprep.subr.mxu0 0.0
    %1777 = vmatpush2.xpose.msra.mxu0 0.0
    %1778 = vmatprep.subr.mxu0 0.0
    %1779 = vmatpush2.xpose.msra.mxu0 0.0
    %1780 = vmatprep.subr.mxu0 0.0
    %1781 = vmatpush2.xpose.msra.mxu0 0.0
    %1782 = vmatprep.mubr.f32.mxu0 0.0
    %1783 = vmatmul.mubr.f32.gmra.mxu0 %v1714
    %v1784 = vpop.f32.mrf.mxu0
    %v1785 = vadd.f32 %v1702, %v1784
    %v1786 = vpop.f32.mrf.mxu0
    %1787 = vdwg.mxu0
    %v1788 = vxor.u32 %v1785, 2147483648
    %v1789 = vmul.f32 %v1788, 1.442695
    %v1790 = vpow.pop %v1789
    %v1791 = vadd.f32 %v1790, 1.0
    %v1792 = vrcp.pop %v1791
    %v1793 = vmul.f32 1.0, %v1792
    %vm1794 = vcmask 8192
    %1795 = vst.msk [vmem:[#allocation3] sm:$0x1] %vm1794, %v1793
    // Predicated region
    $region38: #{featured_lstm_discriminator.1} parent=1 // pred_check
      _
    $region39: #{featured_lstm_discriminator.1} parent=1 // pred_check_branch
      %1797 = sbr.rel (0) target = $region41
    $region40: #{featured_lstm_discriminator.1} parent=1 // pred_region
      %s1799 = ssub.s32 16, 16
      %1800 = vsyncadd [#allocation4], %s1799
      %s1802 = sshll.u32 [#allocation3], 4
      %s1803 = int_to_ptr.vmem [resolvable:$true] %s1802
      %1805 = dma.vmem_to_hbm [thread:$0]  %s1803, 16, %s9, [#allocation4]
    $region41: #{featured_lstm_discriminator.1} parent=1 // pred_fallthru
      _
    // Predicated region
    $region42: #{featured_lstm_discriminator.1} parent=1 // pred_check
      _
    $region43: #{featured_lstm_discriminator.1} parent=1 // pred_check_branch
      %1807 = sbr.rel (0) target = $region45
    $region44: #{featured_lstm_discriminator.1} parent=1 // pred_region
      %1808 = dma.done [#allocation4], 16
    $region45: #{featured_lstm_discriminator.1} parent=1 // pred_fallthru
      _
    %1809 = vsyncpa [#allocation4], 1

</llo_original>
